<compile_context>
chip_gen: v7x
topology: tpu7x:2x2x1
jax: 0.10.0
libtpu: 0.0.40
codegen_flags: <defaults>
</compile_context>

<pallas_src>
import functools

import jax
import jax.numpy as jnp
from jax.experimental import pallas as pl
from jax.experimental.pallas import tpu as pltpu

# dims of BaseNet
DIM1, DIM2, DIM3, DIM4, DIM5 = 32, 64, 128, 256, 512
LSTM_HIDDEN = 512
BN_EPS = 1e-5


def _round_up(x, m):
    return (x + m - 1) // m * m


# -----------------------------------------------------------------------------
# elementwise helpers (used INSIDE Pallas kernels)
# -----------------------------------------------------------------------------
def _erf(x):
    # Abramowitz & Stegun 7.1.26, |err| < 1.5e-7 — close to exact nn.GELU.
    a1, a2, a3, a4, a5 = 0.254829592, -0.284496736, 1.421413741, -1.453152027, 1.061405429
    p = 0.3275911
    sgn = jnp.where(x >= 0.0, 1.0, -1.0)
    ax = jnp.abs(x)
    t = 1.0 / (1.0 + p * ax)
    poly = ((((a5 * t + a4) * t + a3) * t + a2) * t + a1) * t
    return sgn * (1.0 - poly * jnp.exp(-ax * ax))


def _gelu(x):
    return 0.5 * x * (1.0 + _erf(x * 0.7071067811865476))


def _sigmoid(x):
    return 1.0 / (1.0 + jnp.exp(-x))


# -----------------------------------------------------------------------------
# Pallas kernel 1: tiled bf16 matmul + bias (+ fused per-column BN statistics)
# -----------------------------------------------------------------------------
def _mm_kernel(x_ref, w_ref, b_ref, *refs, multi_k, with_stats):
    if with_stats:
        if multi_k:
            o_ref, s_ref, q_ref, acc_ref = refs
        else:
            o_ref, s_ref, q_ref = refs
            acc_ref = None
    else:
        if multi_k:
            o_ref, acc_ref = refs
        else:
            (o_ref,) = refs
            acc_ref = None

    def _finalize(y):
        o_ref[...] = y
        if with_stats:
            s = jnp.sum(y, axis=0, keepdims=True)              # (1, tn)
            q = jnp.sum(y * y, axis=0, keepdims=True)          # (1, tn)
            s_ref[...] = jnp.broadcast_to(s, s_ref.shape)      # (8, tn)
            q_ref[...] = jnp.broadcast_to(q, q_ref.shape)

    if multi_k:
        @pl.when(pl.program_id(2) == 0)
        def _():
            acc_ref[...] = jnp.zeros_like(acc_ref)

        acc_ref[...] += jnp.dot(x_ref[...], w_ref[...],
                                preferred_element_type=jnp.float32)

        @pl.when(pl.program_id(2) == pl.num_programs(2) - 1)
        def _():
            _finalize(acc_ref[...] + b_ref[...])
    else:
        _finalize(jnp.dot(x_ref[...], w_ref[...],
                          preferred_element_type=jnp.float32) + b_ref[...])


def _pick_tiles(M, K, N):
    Kp = _round_up(K, 128)
    Np = _round_up(N, 128)
    tk = 256 if Kp % 256 == 0 else 128
    tn = 256 if Np % 256 == 0 else 128
    tm = min(512, _round_up(M, 128))
    Mp = _round_up(M, tm)
    return tm, tn, tk, Mp, Kp, Np


@functools.partial(jax.jit, static_argnames=("tm", "tn", "tk", "with_stats"))
def _mm_padded(xp, wp, bp, *, tm, tn, tk, with_stats):
    Mp, Kp = xp.shape
    _, Np = wp.shape
    ni, nj, nk = Mp // tm, Np // tn, Kp // tk
    multi_k = nk > 1
    kern = functools.partial(_mm_kernel, multi_k=multi_k, with_stats=with_stats)

    if with_stats:
        out_shape = (jax.ShapeDtypeStruct((Mp, Np), jnp.float32),
                     jax.ShapeDtypeStruct((8 * ni, Np), jnp.float32),
                     jax.ShapeDtypeStruct((8 * ni, Np), jnp.float32))
        out_specs = (pl.BlockSpec((tm, tn), lambda j, i, k: (i, j)),
                     pl.BlockSpec((8, tn), lambda j, i, k: (i, j)),
                     pl.BlockSpec((8, tn), lambda j, i, k: (i, j)))
    else:
        out_shape = jax.ShapeDtypeStruct((Mp, Np), jnp.float32)
        out_specs = pl.BlockSpec((tm, tn), lambda j, i, k: (i, j))

    scratch = [pltpu.VMEM((tm, tn), jnp.float32)] if multi_k else []

    return pl.pallas_call(
        kern,
        out_shape=out_shape,
        grid_spec=pltpu.PrefetchScalarGridSpec(
            num_scalar_prefetch=0,
            grid=(nj, ni, nk),
            in_specs=[pl.BlockSpec((tm, tk), lambda j, i, k: (i, k)),
                      pl.BlockSpec((tk, tn), lambda j, i, k: (k, j)),
                      pl.BlockSpec((1, tn), lambda j, i, k: (0, j))],
            out_specs=out_specs,
            scratch_shapes=scratch),
        compiler_params=pltpu.CompilerParams(
            dimension_semantics=("parallel", "parallel", "arbitrary")),
    )(xp, wp, bp)


def matmul_bias(x, w, b):
    """x:(M,K), w:(K,N), b:(N,) -> (M,N) f32.  bf16 operands, f32 accumulation."""
    M, K = x.shape
    N = w.shape[1]
    tm, tn, tk, Mp, Kp, Np = _pick_tiles(M, K, N)
    xp = jnp.pad(x.astype(jnp.bfloat16), ((0, Mp - M), (0, Kp - K)))
    wp = jnp.pad(w.astype(jnp.bfloat16), ((0, Kp - K), (0, Np - N)))
    bp = jnp.pad(b.astype(jnp.float32).reshape(1, -1), ((0, 0), (0, Np - N)))
    z = _mm_padded(xp, wp, bp, tm=tm, tn=tn, tk=tk, with_stats=False)
    return z[:M, :N]


def matmul_bias_stats(x, w, b):
    """Matmul+bias with per-column batch mean/var fused into the epilogue.
    Returns (z_padded[Mp,Np] f32, mean[N], var[N])."""
    M, K = x.shape
    N = w.shape[1]
    tm, tn, tk, Mp, Kp, Np = _pick_tiles(M, K, N)
    xp = jnp.pad(x.astype(jnp.bfloat16), ((0, Mp - M), (0, Kp - K)))
    wp = jnp.pad(w.astype(jnp.bfloat16), ((0, Kp - K), (0, Np - N)))
    b32 = b.astype(jnp.float32)
    bp = jnp.pad(b32.reshape(1, -1), ((0, 0), (0, Np - N)))
    z, s_p, q_p = _mm_padded(xp, wp, bp, tm=tm, tn=tn, tk=tk, with_stats=True)
    ni = Mp // tm
    s = s_p.reshape(ni, 8, Np)[:, 0, :N].sum(axis=0)
    q = q_p.reshape(ni, 8, Np)[:, 0, :N].sum(axis=0)
    # padded rows contribute exactly `bias` (zero bf16 row dot -> 0, + f32 bias)
    pad_rows = Mp - M
    s = s - pad_rows * b32
    q = q - pad_rows * b32 * b32
    mean = s / M
    var = jnp.maximum(q / M - mean * mean, 0.0)
    return z, mean, var


# -----------------------------------------------------------------------------
# Pallas kernel 2: fused per-channel affine (folded BatchNorm) + activation
# -----------------------------------------------------------------------------
def _affine_act_kernel(z_ref, a_ref, b_ref, o_ref, *, act):
    y = z_ref[...] * a_ref[...] + b_ref[...]
    if act == "gelu":
        y = _gelu(y)
    elif act == "tanh":
        y = jnp.tanh(y)
    o_ref[...] = y.astype(o_ref.dtype)


@functools.partial(jax.jit, static_argnames=("act", "out_dtype"))
def _affine_act_call(zp, ap, bp, *, act, out_dtype):
    Mp, Cp = zp.shape
    ta = Mp
    for t in (1024, 512, 256, 128):
        if Mp % t == 0:
            ta = t
            break
    kern = functools.partial(_affine_act_kernel, act=act)
    return pl.pallas_call(
        kern,
        out_shape=jax.ShapeDtypeStruct((Mp, Cp), out_dtype),
        grid_spec=pltpu.PrefetchScalarGridSpec(
            num_scalar_prefetch=0,
            grid=(Mp // ta,),
            in_specs=[pl.BlockSpec((ta, Cp), lambda i: (i, 0)),
                      pl.BlockSpec((1, Cp), lambda i: (0, 0)),
                      pl.BlockSpec((1, Cp), lambda i: (0, 0))],
            out_specs=pl.BlockSpec((ta, Cp), lambda i: (i, 0))),
        compiler_params=pltpu.CompilerParams(dimension_semantics=("parallel",)),
    )(zp, ap, bp)


def affine_act(z_padded, scale, shift, M, C, act, out_dtype):
    Mp, Cp = z_padded.shape
    ap = jnp.pad(scale.reshape(1, -1).astype(jnp.float32), ((0, 0), (0, Cp - C)))
    bp = jnp.pad(shift.reshape(1, -1).astype(jnp.float32), ((0, 0), (0, Cp - C)))
    y = _affine_act_call(z_padded, ap, bp, act=act, out_dtype=out_dtype)
    return y[:M, :C]


# -----------------------------------------------------------------------------
# Pallas kernel 3: full LSTM recurrence — h, c, W_hh resident in VMEM, grid=(T,)
# -----------------------------------------------------------------------------
def _lstm_seq_kernel(pre_ref, whh_ref, y_ref, h_ref, c_ref):
    t = pl.program_id(0)

    @pl.when(t == 0)
    def _():
        h_ref[...] = jnp.zeros_like(h_ref)
        c_ref[...] = jnp.zeros_like(c_ref)

    H = h_ref.shape[-1]
    gates = pre_ref[0] + jnp.dot(h_ref[...], whh_ref[...],
                                 preferred_element_type=jnp.float32)
    i = _sigmoid(gates[:, 0:H])
    f = _sigmoid(gates[:, H:2 * H])
    g = jnp.tanh(gates[:, 2 * H:3 * H])
    o = _sigmoid(gates[:, 3 * H:4 * H])
    c = f * c_ref[...] + i * g
    c_ref[...] = c
    h = o * jnp.tanh(c)
    h_ref[...] = h
    y_ref[0] = h


@jax.jit
def _lstm_seq_call(pre, whh):
    T, Bp, H4 = pre.shape
    H = whh.shape[0]
    return pl.pallas_call(
        _lstm_seq_kernel,
        out_shape=jax.ShapeDtypeStruct((T, Bp, H), jnp.float32),
        grid_spec=pltpu.PrefetchScalarGridSpec(
            num_scalar_prefetch=0,
            grid=(T,),
            in_specs=[pl.BlockSpec((1, Bp, H4), lambda t: (t, 0, 0)),
                      pl.BlockSpec((H, H4), lambda t: (0, 0))],
            out_specs=pl.BlockSpec((1, Bp, H), lambda t: (t, 0, 0)),
            scratch_shapes=[pltpu.VMEM((Bp, H), jnp.float32),
                            pltpu.VMEM((Bp, H), jnp.float32)]),
        compiler_params=pltpu.CompilerParams(dimension_semantics=("arbitrary",)),
    )(pre, whh)


# -----------------------------------------------------------------------------
# conv / deconv blocks built on the Pallas kernels (NHWC; im2col glue in JAX)
# -----------------------------------------------------------------------------
def _im2col_nhwc(x, kh, kw, sh, sw, ph, pw):
    """NHWC patch extraction with K order (kh, kw, Cin); returns bf16 cols."""
    # TODO(synk): 3x3 decoder convs still materialize the kh*kw-inflated cols
    # buffer; a tap-looped K-grid would avoid it.
    N, H, W, C = x.shape
    Hout = (H + 2 * ph - kh) // sh + 1
    Wout = (W + 2 * pw - kw) // sw + 1
    x = x.astype(jnp.bfloat16)
    if kh == 1 and kw == 1 and sh == 1 and sw == 1 and ph == 0 and pw == 0:
        return x.reshape(N * H * W, C), Hout, Wout
    if ph == 0 and pw == 0 and sh == 1 and sw == 1 and Hout == 1 and Wout == 1:
        # kernel covers the whole spatial extent (e.g. the [3,36] encoder head)
        return x.reshape(N, H * W * C), 1, 1
    if ph or pw:
        x = jnp.pad(x, ((0, 0), (ph, ph), (pw, pw), (0, 0)))
    patches = []
    for i in range(kh):
        for j in range(kw):
            patches.append(x[:, i:i + (Hout - 1) * sh + 1:sh,
                             j:j + (Wout - 1) * sw + 1:sw, :])
    p = jnp.stack(patches, axis=3)                  # (N, Hout, Wout, kh*kw, C)
    return p.reshape(N * Hout * Wout, kh * kw * C), Hout, Wout


@functools.partial(jax.jit,
                   static_argnames=("kh", "kw", "sh", "sw", "ph", "pw",
                                    "act", "out_dtype"))
def _conv_bn_act_nhwc(x, w, b, gamma, beta, *, kh, kw, sh, sw, ph, pw,
                      act, out_dtype):
    """Conv2d + BatchNorm2d(train-mode batch stats) + activation. x: NHWC."""
    N, H, W, C = x.shape
    Cout = w.shape[0]
    cols, Hout, Wout = _im2col_nhwc(x, kh, kw, sh, sw, ph, pw)
    w2 = jnp.transpose(w, (2, 3, 1, 0)).reshape(kh * kw * C, Cout)
    M = N * Hout * Wout
    z, mean, var = matmul_bias_stats(cols, w2, b)            # z stays padded
    inv = jax.lax.rsqrt(var + BN_EPS)
    scale = gamma * inv
    shift = beta - mean * scale
    y = affine_act(z, scale, shift, M, Cout, act, out_dtype)  # (M, Cout)
    return y.reshape(N, Hout, Wout, Cout)


def conv2d_block(x, p, stride, padding, act="gelu", out_dtype=jnp.bfloat16):
    kh, kw = int(p["w"].shape[2]), int(p["w"].shape[3])
    return _conv_bn_act_nhwc(x, p["w"], p["b"], p["gamma"], p["beta"],
                             kh=kh, kw=kw, sh=stride[0], sw=stride[1],
                             ph=padding[0], pw=padding[1],
                             act=act, out_dtype=out_dtype)


def deconv2d_block(x, p, stride, padding, act="gelu", out_dtype=jnp.bfloat16):
    """ConvTranspose2d + BN + GELU via zero-dilation + flipped-kernel conv."""
    # TODO(synk): phase-split (4x 2x2 sub-kernels) would avoid the ~75% zero MACs.
    wt = p["w"]                                      # (Cin, Cout, kh, kw)
    Cin, Cout, kh, kw = wt.shape
    s = stride
    N, H, W, C = x.shape
    Hd, Wd = (H - 1) * s + 1, (W - 1) * s + 1
    xd = jnp.zeros((N, Hd, Wd, C), x.dtype).at[:, ::s, ::s, :].set(x)
    w_conv = jnp.flip(wt, axis=(2, 3)).transpose(1, 0, 2, 3)  # (Cout, Cin, kh, kw)
    q = {"w": w_conv, "b": p["b"], "gamma": p["gamma"], "beta": p["beta"]}
    return conv2d_block(xd, q, (1, 1), (kh - 1 - padding, kw - 1 - padding),
                        act=act, out_dtype=out_dtype)


# -----------------------------------------------------------------------------
# bilinear resize, align_corners=True (cheap gather + lerp, NHWC)
# -----------------------------------------------------------------------------
# TODO(synk): resize runs as XLA gather+lerp glue rather than a Pallas kernel;
# the heavy compute around it (convs / BN / activations) is all Pallas.
@functools.partial(jax.jit, static_argnames=("out_size",))
def bilinear_resize_nhwc(x, out_size):
    N, H, W, C = x.shape

    def idx(in_size):
        src = jnp.arange(out_size, dtype=jnp.float32) * ((in_size - 1) / (out_size - 1))
        i0 = jnp.clip(jnp.floor(src).astype(jnp.int32), 0, in_size - 2)
        frac = src - i0.astype(jnp.float32)
        return i0, frac

    h0, hf = idx(H)
    w0, wf = idx(W)
    x = x.astype(jnp.float32)
    top = jnp.take(x, h0, axis=1)
    bot = jnp.take(x, h0 + 1, axis=1)
    xh = top * (1.0 - hf)[None, :, None, None] + bot * hf[None, :, None, None]
    left = jnp.take(xh, w0, axis=2)
    right = jnp.take(xh, w0 + 1, axis=2)
    return left * (1.0 - wf)[None, None, :, None] + right * wf[None, None, :, None]


# -----------------------------------------------------------------------------
# network definition (parameters + forward)
# -----------------------------------------------------------------------------
# (cin, cout, (kh,kw), (sh,sw), (ph,pw)) — SharedEncoder convblocks 1 .. 8
ENC_CFG = [
    (3,    DIM1, (7, 1),  (2, 1), (3, 0)),
    (DIM1, DIM2, (3, 1),  (2, 1), (1, 0)),
    (DIM2, DIM2, (3, 1),  (1, 1), (1, 0)),
    (DIM2, DIM2, (3, 1),  (2, 1), (1, 0)),
    (DIM2, DIM2, (3, 1),  (1, 1), (1, 0)),
    (DIM2, DIM3, (3, 1),  (2, 1), (1, 0)),
    (DIM3, DIM3, (3, 1),  (1, 1), (1, 0)),
    (DIM3, DIM3, (3, 3),  (2, 2), (1, 1)),
    (DIM3, DIM3, (3, 3),  (1, 1), (1, 1)),
    (DIM3, DIM4, (3, 3),  (2, 2), (1, 1)),
    (DIM4, DIM4, (3, 3),  (1, 1), (1, 1)),
    (DIM4, DIM4, (3, 3),  (2, 2), (1, 1)),
    (DIM4, DIM4, (3, 3),  (1, 1), (1, 1)),
    (DIM4, DIM5, (3, 36), (1, 1), (0, 0)),   # ceil(286 * 1.0 / 8) == 36
]


class KeyGen:
    def __init__(self, seed):
        self.key = jax.random.PRNGKey(seed)

    def __call__(self):
        self.key, sub = jax.random.split(self.key)
        return sub


def _conv_block_params(kg, cin, cout, kh, kw):
    return {
        "w": 0.05 * jax.random.normal(kg(), (cout, cin, kh, kw), jnp.float32),
        "b": 0.05 * jax.random.normal(kg(), (cout,), jnp.float32),
        "gamma": jnp.ones((cout,), jnp.float32),
        "beta": jnp.zeros((cout,), jnp.float32),
    }


def _deconv_block_params(kg, cin, cout, kh, kw):
    return {
        "w": 0.05 * jax.random.normal(kg(), (cin, cout, kh, kw), jnp.float32),
        "b": 0.05 * jax.random.normal(kg(), (cout,), jnp.float32),
        "gamma": jnp.ones((cout,), jnp.float32),
        "beta": jnp.zeros((cout,), jnp.float32),
    }


def _lstm_layer_params(kg, in_size, hidden):
    return {
        "w_ih": 0.05 * jax.random.normal(kg(), (4 * hidden, in_size), jnp.float32),
        "w_hh": 0.05 * jax.random.normal(kg(), (4 * hidden, hidden), jnp.float32),
        "b_ih": 0.05 * jax.random.normal(kg(), (4 * hidden,), jnp.float32),
        "b_hh": 0.05 * jax.random.normal(kg(), (4 * hidden,), jnp.float32),
    }


def _decoder_params(kg):
    # TODO(synk): channel_adjust 1x1 convs omitted — never executed when
    # final_output_size >= 64 (both decoders here are 128 and 256).
    return {
        "d1_1": _deconv_block_params(kg, DIM5, DIM5, 4, 4),
        "d1_2": _conv_block_params(kg, DIM5, DIM5, 3, 3),
        "d2_1": _deconv_block_params(kg, DIM5, DIM4, 4, 4),
        "d2_2": _conv_block_params(kg, DIM4, DIM4, 3, 3),
        "d3_1": _deconv_block_params(kg, DIM4, DIM3, 4, 4),
        "d3_2": _conv_block_params(kg, DIM3, DIM3, 3, 3),
        "d4_1": _deconv_block_params(kg, DIM3, DIM2, 4, 4),
        "d4_2": _conv_block_params(kg, DIM2, DIM2, 3, 3),
        "d5_1": _deconv_block_params(kg, DIM2, DIM1, 4, 4),
        "d5_2": _conv_block_params(kg, DIM1, DIM1, 3, 3),
        "d6":   _conv_block_params(kg, DIM1, 1, 3, 3),
    }


def build_params(seed=1):
    kg = KeyGen(seed)
    return {
        "enc_v": [_conv_block_params(kg, ci, co, kh, kw)
                  for (ci, co, (kh, kw), _, _) in ENC_CFG],
        "enc_h": [_conv_block_params(kg, ci, co, kh, kw)
                  for (ci, co, (kh, kw), _, _) in ENC_CFG],
        "fusion": _conv_block_params(kg, 2 * DIM5, DIM5, 3, 3),
        "lstm": [_lstm_layer_params(kg, DIM5, LSTM_HIDDEN),
                 _lstm_layer_params(kg, LSTM_HIDDEN, LSTM_HIDDEN)],
        "dec128": _decoder_params(kg),
        "dec256": _decoder_params(kg),
    }


def shared_encoder(x, enc_params):
    # x: (N, H, W, 3) NHWC
    for p, (_, _, _, stride, padding) in zip(enc_params, ENC_CFG):
        x = conv2d_block(x, p, stride, padding, act="gelu")
    # adaptive_avg_pool2d((1,1)): spatial is already (1,1); mean is glue
    return jnp.mean(x.astype(jnp.float32), axis=(1, 2), keepdims=True)  # (N,1,1,512)


def dual_encoder(x1, x2, params):
    batch, T, C, H, W = x1.shape
    a = x1.reshape(batch * T, C, H, W).transpose(0, 2, 3, 1)    # NHWC
    b = x2.reshape(batch * T, C, H, W).transpose(0, 2, 3, 1)
    a = shared_encoder(a, params["enc_v"])
    b = shared_encoder(b, params["enc_h"])
    x = jnp.concatenate([a, b], axis=-1)                        # (N,1,1,1024)
    x = conv2d_block(x, params["fusion"], (1, 1), (1, 1), act="gelu")
    return x.reshape(batch, T, DIM5)


def lstm_forward(x, lstm_params):
    B, T, D = x.shape
    H = LSTM_HIDDEN
    Bp = _round_up(max(B, 8), 8)
    y = x
    for lp in lstm_params:
        # input projection for all timesteps in one big MXU matmul
        pre = matmul_bias(y.reshape(B * T, -1), lp["w_ih"].T,
                          lp["b_ih"] + lp["b_hh"])              # (B*T, 4H)
        pre = pre.reshape(B, T, 4 * H).transpose(1, 0, 2)       # (T, B, 4H)
        pre = jnp.pad(pre, ((0, 0), (0, Bp - B), (0, 0)))
        whh = lp["w_hh"].T.astype(jnp.float32)                  # (H, 4H)
        yseq = _lstm_seq_call(pre, whh)                         # (T, Bp, H)
        y = yseq[:, :B, :].transpose(1, 0, 2)                   # (B, T, H)
    return y


def decoder_forward(x, dp, final_size):
    x = deconv2d_block(x, dp["d1_1"], stride=2, padding=0)      # 1 -> 4
    x = conv2d_block(x, dp["d1_2"], (1, 1), (1, 1))
    x = deconv2d_block(x, dp["d2_1"], stride=2, padding=1)      # 4 -> 8
    x = conv2d_block(x, dp["d2_2"], (1, 1), (1, 1))
    x = deconv2d_block(x, dp["d3_1"], stride=2, padding=1)      # 8 -> 16
    x = conv2d_block(x, dp["d3_2"], (1, 1), (1, 1))
    x = deconv2d_block(x, dp["d4_1"], stride=2, padding=1)      # 16 -> 32
    x = conv2d_block(x, dp["d4_2"], (1, 1), (1, 1))
    x = deconv2d_block(x, dp["d5_1"], stride=2, padding=1)      # 32 -> 64
    x = conv2d_block(x, dp["d5_2"], (1, 1), (1, 1))
    # last_channels == dim1 here, so no channel_adjust (final sizes are >= 64)
    if x.shape[1] != final_size or x.shape[2] != final_size:
        x = bilinear_resize_nhwc(x, final_size)                 # align_corners=True
    x = conv2d_block(x, dp["d6"], (1, 1), (1, 1), act="tanh",
                     out_dtype=jnp.float32)
    return x                                                    # (N, fs, fs, 1) NHWC


def model_forward(x1, x2, params):
    if x1.ndim == 4:
        x1 = x1[None]
    if x2.ndim == 4:
        x2 = x2[None]
    batch, T, C, H, W = x1.shape
    latent = dual_encoder(x1, x2, params)                       # (batch, T, 512)
    latent = lstm_forward(latent, params["lstm"])               # (batch, T, 512)
    lat = latent.reshape(batch * T, 1, 1, LSTM_HIDDEN)          # NHWC 1x1 spatial
    out128 = decoder_forward(lat, params["dec128"], 128)
    out256 = decoder_forward(lat, params["dec256"], 256)
    out128 = out128.reshape(batch, T, 128, 128, 1).transpose(0, 1, 4, 2, 3)
    out256 = out256.reshape(batch, T, 256, 256, 1).transpose(0, 1, 4, 2, 3)
    return out128, out256


# -----------------------------------------------------------------------------
# main
# -----------------------------------------------------------------------------
if __name__ == "__main__":
    # Smallest geometry the module's hard-coded encoder accepts:
    # convblock8 has kernel [3, 36] (= ceil(286/8)) after 7 H-halvings and
    # 3 W-halvings, so H=288, W=286 yields a 3x36 map -> 1x1 latent.
    batch, T, C, H, W = 1, 2, 3, 288, 286

    params = build_params(seed=1)

    key = jax.random.PRNGKey(0)
    k1, k2 = jax.random.split(key)
    x1 = jax.random.normal(k1, (batch, T, C, H, W), jnp.float32)
    x2 = jax.random.normal(k2, (batch, T, C, H, W), jnp.float32)

    out128, out256 = model_forward(x1, x2, params)
    out128, out256 = jax.block_until_ready((out128, out256))

    assert out128.shape == (batch, T, 1, 128, 128)
    assert out256.shape == (batch, T, 1, 256, 256)
    assert bool(jnp.all(jnp.isfinite(out128))) and bool(jnp.all(jnp.isfinite(out256)))
    print("KERNEL_OK")
</pallas_src>

<mosaic_0001>
module attributes {stable_mosaic.version = 11 : i64} {
  func.func @_mm_kernel(%arg0: i32, %arg1: i32, %arg2: i32, %arg3: memref<512x128xbf16, #tpu.memory_space<vmem>>, %arg4: memref<128x128xbf16, #tpu.memory_space<vmem>>, %arg5: memref<1x128xf32, #tpu.memory_space<vmem>>, %arg6: memref<512x128xf32, #tpu.memory_space<vmem>>, %arg7: memref<8x128xf32, #tpu.memory_space<vmem>>, %arg8: memref<8x128xf32, #tpu.memory_space<vmem>>) attributes {dimension_semantics = [#tpu.dimension_semantics<parallel>, #tpu.dimension_semantics<parallel>, #tpu.dimension_semantics<arbitrary>], iteration_bounds = array<i64: 1, 161, 1>, scalar_prefetch = 0 : i64, scratch_operands = 0 : i64, tpu.core_type = #tpu.core_type<tc>, window_params = [{transform_indices = @transform_0, window_bounds = array<i64: 512, 128>}, {transform_indices = @transform_1, window_bounds = array<i64: 128, 128>}, {transform_indices = @transform_2, window_bounds = array<i64: 1, 128>}, {transform_indices = @transform_3, window_bounds = array<i64: 512, 128>}, {transform_indices = @transform_4, window_bounds = array<i64: 8, 128>}, {transform_indices = @transform_5, window_bounds = array<i64: 8, 128>}]} {
    %c0 = arith.constant 0 : index
    %c0_0 = arith.constant 0 : index
    %0 = vector.load %arg3[%c0, %c0_0] : memref<512x128xbf16, #tpu.memory_space<vmem>>, vector<512x128xbf16>
    %c0_1 = arith.constant 0 : index
    %c0_2 = arith.constant 0 : index
    %1 = vector.load %arg4[%c0_1, %c0_2] : memref<128x128xbf16, #tpu.memory_space<vmem>>, vector<128x128xbf16>
    %cst = arith.constant dense<0.000000e+00> : vector<512x128xf32>
    %2 = tpu.matmul %0, %1, %cst {dimension_numbers = #tpu.dot_dimension_numbers<[1], [0], [0], [1], [0, 0, 1, 1], [], []>} : vector<512x128xbf16>, vector<128x128xbf16>, vector<512x128xf32> -> vector<512x128xf32>
    %c0_3 = arith.constant 0 : index
    %c0_4 = arith.constant 0 : index
    %3 = vector.load %arg5[%c0_3, %c0_4] : memref<1x128xf32, #tpu.memory_space<vmem>>, vector<1x128xf32>
    %4 = vector.broadcast %3 : vector<1x128xf32> to vector<512x128xf32>
    %5 = arith.addf %2, %4 : vector<512x128xf32>
    %c0_5 = arith.constant 0 : index
    %c0_6 = arith.constant 0 : index
    %6 = vector.load %arg6[%c0_5, %c0_6] : memref<512x128xf32, #tpu.memory_space<vmem>>, vector<512x128xf32>
    tpu.vector_store %arg6[%c0_5, %c0_6], %5 {strides = array<i32>} : memref<512x128xf32, #tpu.memory_space<vmem>>, vector<512x128xf32>,
    %cst_7 = arith.constant dense<0.000000e+00> : vector<128xf32>
    %7 = vector.multi_reduction <add>, %5, %cst_7 [0] : vector<512x128xf32> to vector<128xf32>
    %8 = vector.shape_cast %7 : vector<128xf32> to vector<1x128xf32>
    %9 = arith.mulf %5, %5 : vector<512x128xf32>
    %cst_8 = arith.constant dense<0.000000e+00> : vector<128xf32>
    %10 = vector.multi_reduction <add>, %9, %cst_8 [0] : vector<512x128xf32> to vector<128xf32>
    %11 = vector.shape_cast %10 : vector<128xf32> to vector<1x128xf32>
    %12 = vector.shape_cast %8 : vector<1x128xf32> to vector<1x128xf32>
    %13 = vector.broadcast %12 : vector<1x128xf32> to vector<8x128xf32>
    %c0_9 = arith.constant 0 : index
    %c0_10 = arith.constant 0 : index
    %14 = vector.load %arg7[%c0_9, %c0_10] : memref<8x128xf32, #tpu.memory_space<vmem>>, vector<8x128xf32>
    tpu.vector_store %arg7[%c0_9, %c0_10], %13 {strides = array<i32>} : memref<8x128xf32, #tpu.memory_space<vmem>>, vector<8x128xf32>,
    %15 = vector.shape_cast %11 : vector<1x128xf32> to vector<1x128xf32>
    %16 = vector.broadcast %15 : vector<1x128xf32> to vector<8x128xf32>
    %c0_11 = arith.constant 0 : index
    %c0_12 = arith.constant 0 : index
    %17 = vector.load %arg8[%c0_11, %c0_12] : memref<8x128xf32, #tpu.memory_space<vmem>>, vector<8x128xf32>
    tpu.vector_store %arg8[%c0_11, %c0_12], %16 {strides = array<i32>} : memref<8x128xf32, #tpu.memory_space<vmem>>, vector<8x128xf32>,
    return
  }
  func.func @transform_0(%arg0: i32, %arg1: i32, %arg2: i32) -> (i32, i32) {
    %c0_i32 = arith.constant 0 : i32
    return %arg1, %arg2 : i32, i32
  }
  func.func @transform_1(%arg0: i32, %arg1: i32, %arg2: i32) -> (i32, i32) {
    %c0_i32 = arith.constant 0 : i32
    return %arg2, %arg0 : i32, i32
  }
  func.func @transform_2(%arg0: i32, %arg1: i32, %arg2: i32) -> (i32, i32) {
    %c0_i32 = arith.constant 0 : i32
    %c0_i32_0 = arith.constant 0 : i32
    return %c0_i32, %arg0 : i32, i32
  }
  func.func @transform_3(%arg0: i32, %arg1: i32, %arg2: i32) -> (i32, i32) {
    %c0_i32 = arith.constant 0 : i32
    return %arg1, %arg0 : i32, i32
  }
  func.func @transform_4(%arg0: i32, %arg1: i32, %arg2: i32) -> (i32, i32) {
    %c0_i32 = arith.constant 0 : i32
    return %arg1, %arg0 : i32, i32
  }
  func.func @transform_5(%arg0: i32, %arg1: i32, %arg2: i32) -> (i32, i32) {
    %c0_i32 = arith.constant 0 : i32
    return %arg1, %arg0 : i32, i32
  }
}

</mosaic_0001>

<llo_original>
// kernel: _mm_padded.1
$region0: #{_mm_padded.1}
  #allocation0 [shape = 'u32[]', space=smem, size = 0x4, offset = 0x4, fixed_abs, tag = 'smem constant byte address 0x4 - core index']
  #allocation1 [shape = 'u32[144,128]{1,0:T(1,128)}', space=vmem, size = 0x12000, scoped, tag = 'internal scratch']
  %s0 = inlined_call_operand.hbm [shape: bf16[82432,128], index: 0, kind: input, shape index: {}]
  %s1 = inlined_call_operand.hbm [shape: bf16[128,128], index: 1, kind: input, shape index: {}]
  %s2 = inlined_call_operand.hbm [shape: f32[1,128], index: 2, kind: input, shape index: {}]
  %s3 = inlined_call_operand.hbm [shape: f32[82432,128], index: 3, kind: output, shape index: {0}]
  %s4 = inlined_call_operand.hbm [shape: f32[1288,128], index: 4, kind: output, shape index: {1}]
  %s5 = inlined_call_operand.hbm [shape: f32[1288,128], index: 5, kind: output, shape index: {2}]
  %6 = xla_tuple %s3, %s4, %s5
  %s7 = sld [smem:[#allocation0]]
  $region73: #{_mm_padded.1} parent=0
    _
  %s9 = ssub.s32 1, %s7
  %s10 = scalar_select 0, %s9, %s7
  $region1: #{_mm_padded.1} parent=0
    #allocation2 [shape = 'u8[262144]{0}', space=vmem, size = 0x40000, scoped, tag = 'input window, operand 0']
    #allocation3 [shape = 's32[2]{0}', space=sflag, size = 0x8, scoped, tag = 'scoped memory for _mm_padded.1']
    #allocation4 [shape = 's32[2]{0}', space=sflag, size = 0x8, scoped, tag = 'scoped memory for _mm_padded.1']
    #allocation5 [shape = 'u8[32768]{0}', space=vmem, size = 0x8000, scoped, tag = 'input window, operand 1, single buffered']
    #allocation6 [shape = 's32[1]{0}', space=sflag, size = 0x4, scoped, tag = 'scoped memory for _mm_padded.1']
    #allocation7 [shape = 'u8[512]{0}', space=vmem, size = 0x400, scoped, tag = 'input window, operand 2, single buffered']
    #allocation8 [shape = 'u8[524288]{0}', space=vmem, size = 0x80000, scoped, tag = 'output window, operand 0']
    #allocation9 [shape = 'u8[8192]{0}', space=vmem, size = 0x2000, scoped, tag = 'output window, operand 1']
    #allocation10 [shape = 's32[2]{0}', space=sflag, size = 0x8, scoped, tag = 'scoped memory for _mm_padded.1']
    #allocation11 [shape = 'u8[8192]{0}', space=vmem, size = 0x2000, scoped, tag = 'output window, operand 2']
    %11 = vsyncpa [#allocation3], 0
    %s12 = scalar_lea.sflag [#allocation3], 1
    %13 = vsyncpa %s12, 0
    %14 = vsyncpa [#allocation6], 0
    %15 = vsyncpa [#allocation4], 0
    %s16 = scalar_lea.sflag [#allocation4], 1
    %17 = vsyncpa %s16, 0
    %18 = vsyncpa [#allocation10], 0
    %s19 = scalar_lea.sflag [#allocation10], 1
    %20 = vsyncpa %s19, 0
    loop: start=0, step=1, limit=163
    $region2: #{_mm_padded.1} parent=1 // loop_pre_header
      _
    $region3: #{_mm_padded.1} parent=1 // loop_header
      %s22 = sphi 0, %s26
      %p23 = scmp.ge.s32.totalorder %s22, 163
      %s29 = sphi 0, %s48
      %s30 = sphi 0, %s44
      %s31 = sphi 0, %s40
      %s32 = sphi 0, %s29
      %s33 = sphi 0, %s30
      %s34 = sphi 0, %s31
      %s35 = sphi 0, %s32
      %s36 = sphi 0, %s33
      %s37 = sphi 0, %s34
      %s53 = sphi 0, %s55
      %s56 = sphi 0, %s53
      %s57 = sphi 0, %s56
      %s73 = sphi 0, %s57
      %s81 = sphi 0, %s83
      %s84 = sphi 0, %s81
      %s85 = sphi 0, %s84
      %s101 = sphi 0, %s85
      %s107 = sphi 0, %s109
      %s110 = sphi 0, %s107
      %s111 = sphi 0, %s110
      %s127 = sphi 0, %s111
      %s135 = sphi 0, %s137
      %s138 = sphi 0, %s135
      %s139 = sphi 0, %s138
      %s155 = sphi 0, %s139
      %s163 = sphi 0, %s165
      %s166 = sphi 0, %s163
      %s167 = sphi 0, %s166
      %s183 = sphi 0, %s167
      %s191 = sphi 0, %s193
      %s194 = sphi 0, %s191
      %s195 = sphi 0, %s194
      %s211 = sphi 0, %s195
    $region4: #{_mm_padded.1} parent=1 // loop_header_branch
      %25 = sbr.rel (%p23) target = $region8
    $region5: #{_mm_padded.1} parent=1 // loop_body
      %s27 = ssub.s32 %s22, 1
      %s28 = ssub.s32 %s22, 2
      %s38 = sadd.s32 1, %s31
      %p39 = scmp.ge.s32.totalorder %s38, 1
      %s40 = scalar_select %p39, 0, %s38
      %s41 = sadd.s32 1, %s30
      %s42 = scalar_select %p39, %s41, %s30
      %p43 = scmp.ge.s32.totalorder %s42, 161
      %s44 = scalar_select %p43, 0, %s42
      %s45 = sadd.s32 1, %s29
      %s46 = scalar_select %p43, %s45, %s29
      %p47 = scmp.ge.s32.totalorder %s46, 1
      %s48 = scalar_select %p47, 0, %s46
      %s49 = ssub.s32 %s30, %s44
      %s50 = ssub.s32 %s31, %s40
      %s51 = sor.u32 %s49, %s50
      %p52 = scmp.eq.s32.totalorder %s51, 0
      %s54 = sadd.s32 %s53, 1
      %s55 = scalar_select %p52, %s53, %s54
      %p58 = pneg %p52
      %p59 = scmp.eq.s32.totalorder %s22, 160
      %p60 = por %p58, %p59
      %p61 = scmp.ne.s32.totalorder %s53, %s56
      %p62 = scmp.eq.s32.totalorder %s22, 0
      %p63 = por %p61, %p62
      %p64 = scmp.ne.s32.totalorder %s53, %s56
      %p65 = scmp.eq.s32.totalorder %s27, 160
      %p66 = por %p64, %p65
      %p67 = scmp.ne.s32.totalorder %s56, %s57
      %p68 = scmp.eq.s32.totalorder %s27, 0
      %p69 = por %p67, %p68
      %p70 = scmp.ne.s32.totalorder %s56, %s57
      %p71 = scmp.eq.s32.totalorder %s28, 160
      %p72 = por %p70, %p71
      %p74 = scmp.ne.s32.totalorder %s57, %s73
      %p75 = scmp.eq.s32.totalorder %s28, 0
      %p76 = por %p74, %p75
      %s77 = ssub.s32 %s31, %s40
      %s78 = ssub.s32 %s29, %s48
      %s79 = sor.u32 %s77, %s78
      %p80 = scmp.eq.s32.totalorder %s79, 0
      %s82 = sadd.s32 %s81, 1
      %s83 = scalar_select %p80, %s81, %s82
      %p86 = pneg %p80
      %p87 = scmp.eq.s32.totalorder %s22, 160
      %p88 = por %p86, %p87
      %p89 = scmp.ne.s32.totalorder %s81, %s84
      %p90 = scmp.eq.s32.totalorder %s22, 0
      %p91 = por %p89, %p90
      %p92 = scmp.ne.s32.totalorder %s81, %s84
      %p93 = scmp.eq.s32.totalorder %s27, 160
      %p94 = por %p92, %p93
      %p95 = scmp.ne.s32.totalorder %s84, %s85
      %p96 = scmp.eq.s32.totalorder %s27, 0
      %p97 = por %p95, %p96
      %p98 = scmp.ne.s32.totalorder %s84, %s85
      %p99 = scmp.eq.s32.totalorder %s28, 160
      %p100 = por %p98, %p99
      %p102 = scmp.ne.s32.totalorder %s85, %s101
      %p103 = scmp.eq.s32.totalorder %s28, 0
      %p104 = por %p102, %p103
      %s105 = ssub.s32 %s29, %s48
      %p106 = scmp.eq.s32.totalorder %s105, 0
      %s108 = sadd.s32 %s107, 1
      %s109 = scalar_select %p106, %s107, %s108
      %p112 = pneg %p106
      %p113 = scmp.eq.s32.totalorder %s22, 160
      %p114 = por %p112, %p113
      %p115 = scmp.ne.s32.totalorder %s107, %s110
      %p116 = scmp.eq.s32.totalorder %s22, 0
      %p117 = por %p115, %p116
      %p118 = scmp.ne.s32.totalorder %s107, %s110
      %p119 = scmp.eq.s32.totalorder %s27, 160
      %p120 = por %p118, %p119
      %p121 = scmp.ne.s32.totalorder %s110, %s111
      %p122 = scmp.eq.s32.totalorder %s27, 0
      %p123 = por %p121, %p122
      %p124 = scmp.ne.s32.totalorder %s110, %s111
      %p125 = scmp.eq.s32.totalorder %s28, 160
      %p126 = por %p124, %p125
      %p128 = scmp.ne.s32.totalorder %s111, %s127
      %p129 = scmp.eq.s32.totalorder %s28, 0
      %p130 = por %p128, %p129
      %s131 = ssub.s32 %s30, %s44
      %s132 = ssub.s32 %s29, %s48
      %s133 = sor.u32 %s131, %s132
      %p134 = scmp.eq.s32.totalorder %s133, 0
      %s136 = sadd.s32 %s135, 1
      %s137 = scalar_select %p134, %s135, %s136
      %p140 = pneg %p134
      %p141 = scmp.eq.s32.totalorder %s22, 160
      %p142 = por %p140, %p141
      %p143 = scmp.ne.s32.totalorder %s135, %s138
      %p144 = scmp.eq.s32.totalorder %s22, 0
      %p145 = por %p143, %p144
      %p146 = scmp.ne.s32.totalorder %s135, %s138
      %p147 = scmp.eq.s32.totalorder %s27, 160
      %p148 = por %p146, %p147
      %p149 = scmp.ne.s32.totalorder %s138, %s139
      %p150 = scmp.eq.s32.totalorder %s27, 0
      %p151 = por %p149, %p150
      %p152 = scmp.ne.s32.totalorder %s138, %s139
      %p153 = scmp.eq.s32.totalorder %s28, 160
      %p154 = por %p152, %p153
      %p156 = scmp.ne.s32.totalorder %s139, %s155
      %p157 = scmp.eq.s32.totalorder %s28, 0
      %p158 = por %p156, %p157
      %s159 = ssub.s32 %s30, %s44
      %s160 = ssub.s32 %s29, %s48
      %s161 = sor.u32 %s159, %s160
      %p162 = scmp.eq.s32.totalorder %s161, 0
      %s164 = sadd.s32 %s163, 1
      %s165 = scalar_select %p162, %s163, %s164
      %p168 = pneg %p162
      %p169 = scmp.eq.s32.totalorder %s22, 160
      %p170 = por %p168, %p169
      %p171 = scmp.ne.s32.totalorder %s163, %s166
      %p172 = scmp.eq.s32.totalorder %s22, 0
      %p173 = por %p171, %p172
      %p174 = scmp.ne.s32.totalorder %s163, %s166
      %p175 = scmp.eq.s32.totalorder %s27, 160
      %p176 = por %p174, %p175
      %p177 = scmp.ne.s32.totalorder %s166, %s167
      %p178 = scmp.eq.s32.totalorder %s27, 0
      %p179 = por %p177, %p178
      %p180 = scmp.ne.s32.totalorder %s166, %s167
      %p181 = scmp.eq.s32.totalorder %s28, 160
      %p182 = por %p180, %p181
      %p184 = scmp.ne.s32.totalorder %s167, %s183
      %p185 = scmp.eq.s32.totalorder %s28, 0
      %p186 = por %p184, %p185
      %s187 = ssub.s32 %s30, %s44
      %s188 = ssub.s32 %s29, %s48
      %s189 = sor.u32 %s187, %s188
      %p190 = scmp.eq.s32.totalorder %s189, 0
      %s192 = sadd.s32 %s191, 1
      %s193 = scalar_select %p190, %s191, %s192
      %p196 = pneg %p190
      %p197 = scmp.eq.s32.totalorder %s22, 160
      %p198 = por %p196, %p197
      %p199 = scmp.ne.s32.totalorder %s191, %s194
      %p200 = scmp.eq.s32.totalorder %s22, 0
      %p201 = por %p199, %p200
      %p202 = scmp.ne.s32.totalorder %s191, %s194
      %p203 = scmp.eq.s32.totalorder %s27, 160
      %p204 = por %p202, %p203
      %p205 = scmp.ne.s32.totalorder %s194, %s195
      %p206 = scmp.eq.s32.totalorder %s27, 0
      %p207 = por %p205, %p206
      %p208 = scmp.ne.s32.totalorder %s194, %s195
      %p209 = scmp.eq.s32.totalorder %s28, 160
      %p210 = por %p208, %p209
      %p212 = scmp.ne.s32.totalorder %s195, %s211
      %p213 = scmp.eq.s32.totalorder %s28, 0
      %p214 = por %p212, %p213
      %p215 = scmp.le.s32.totalorder 1, %s22
      %p216 = scmp.lt.s32.totalorder %s22, 162
      %p217 = pnand %p215, %p216
      %p218 = pneg %p217
      // Predicated region
      $region9: #{_mm_padded.1} parent=5 // pred_check
        _
      $region10: #{_mm_padded.1} parent=5 // pred_check_branch
        %220 = sbr.rel (%p217) target = $region12
      $region11: #{_mm_padded.1} parent=5 // pred_region
        %s221 = ssub.s32 %s22, 1
        // Predicated region
        $region13: #{_mm_padded.1} parent=11 // pred_check
          %p222 = pneg %p97
        $region14: #{_mm_padded.1} parent=11 // pred_check_branch
          %224 = sbr.rel (%p222) target = $region16
        $region15: #{_mm_padded.1} parent=11 // pred_region
          %s225 = smul.u32 16, %s34
          %s227 = ssub.s32 1024, 1024
          %228 = vsyncadd [#allocation6], %s227
          %s229 = sadd.s32 %s32, %s225
          %s230 = smul.addr %s229, 64
          %s231 = scalar_lea.hbm %s1, %s230
          %s232 = sshll.u32 [#allocation5], 4
          %s233 = int_to_ptr.vmem [resolvable:$true] %s232
          %238 = dma.hbm_to_vmem [thread:$0]  %s231, 1024, %s233, [#allocation6], 64, 64, 4
        $region16: #{_mm_padded.1} parent=11 // pred_fallthru
          _
        // Predicated region
        $region17: #{_mm_padded.1} parent=11 // pred_check
          %p239 = pneg %p123
        $region18: #{_mm_padded.1} parent=11 // pred_check_branch
          %241 = sbr.rel (%p239) target = $region20
        $region19: #{_mm_padded.1} parent=11 // pred_region
          %s243 = ssub.s32 16, 16
          %244 = vsyncadd [#allocation6], %s243
          %s245 = smul.addr %s32, 16
          %s246 = scalar_lea.hbm %s2, %s245
          %s248 = sshll.u32 [#allocation7], 4
          %s249 = int_to_ptr.vmem [resolvable:$true] %s248
          %251 = dma.hbm_to_vmem [thread:$0]  %s246, 16, %s249, [#allocation6]
        $region20: #{_mm_padded.1} parent=11 // pred_fallthru
          _
      $region12: #{_mm_padded.1} parent=5 // pred_fallthru
        _
      %p252 = scmp.lt.s32.totalorder %s22, 161
      // Predicated region
      $region21: #{_mm_padded.1} parent=5 // pred_check
        %p253 = pneg %p252
      $region22: #{_mm_padded.1} parent=5 // pred_check_branch
        %255 = sbr.rel (%p253) target = $region24
      $region23: #{_mm_padded.1} parent=5 // pred_region
        // Predicated region
        $region25: #{_mm_padded.1} parent=23 // pred_check
          %p256 = pneg %p63
        $region26: #{_mm_padded.1} parent=23 // pred_check_branch
          %258 = sbr.rel (%p256) target = $region28
        $region27: #{_mm_padded.1} parent=23 // pred_region
          %s259 = sand.u32 %s53, 1
          %s260 = scalar_lea.sflag [#allocation3], %s259
          %s261 = sand.u32 %s53, 1
          %s262 = smul.addr %s261, 256
          %s263 = scalar_lea.vmem [#allocation2], %s262
          %s264 = smul.u32 64, %s30
          %s266 = ssub.s32 4096, 4096
          %267 = vsyncadd %s260, %s266
          %s268 = sadd.s32 %s31, %s264
          %s269 = smul.addr %s268, 64
          %s270 = scalar_lea.hbm %s0, %s269
          %s271 = sshll.u32 %s263, 4
          %s272 = int_to_ptr.vmem [resolvable:$true] %s271
          %277 = dma.hbm_to_vmem [thread:$0]  %s270, 4096, %s272, %s260, 64, 64, 4
        $region28: #{_mm_padded.1} parent=23 // pred_fallthru
          _
      $region24: #{_mm_padded.1} parent=5 // pred_fallthru
        _
      %p278 = scmp.le.s32.totalorder 1, %s22
      %p279 = scmp.lt.s32.totalorder %s22, 162
      %p280 = pnand %p278, %p279
      %p281 = pneg %p280
      // Predicated region
      $region29: #{_mm_padded.1} parent=5 // pred_check
        _
      $region30: #{_mm_padded.1} parent=5 // pred_check_branch
        %283 = sbr.rel (%p280) target = $region32
      $region31: #{_mm_padded.1} parent=5 // pred_region
        %s284 = ssub.s32 %s22, 1
        %s285 = sand.u32 %s56, 1
        %s286 = scalar_lea.sflag [#allocation3], %s285
        %s287 = sand.u32 %s56, 1
        %s288 = smul.addr %s287, 256
        %s289 = scalar_lea.vmem [#allocation2], %s288
        // Predicated region
        $region33: #{_mm_padded.1} parent=31 // pred_check
          %p290 = pneg %p69
        $region34: #{_mm_padded.1} parent=31 // pred_check_branch
          %292 = sbr.rel (%p290) target = $region36
        $region35: #{_mm_padded.1} parent=31 // pred_region
          %293 = dma.done %s286, 4096
        $region36: #{_mm_padded.1} parent=31 // pred_fallthru
          _
        // Predicated region
        $region37: #{_mm_padded.1} parent=31 // pred_check
          %p294 = pneg %p97
        $region38: #{_mm_padded.1} parent=31 // pred_check_branch
          %296 = sbr.rel (%p294) target = $region40
        $region39: #{_mm_padded.1} parent=31 // pred_region
          %297 = dma.done [#allocation6], 1024
        $region40: #{_mm_padded.1} parent=31 // pred_fallthru
          _
        // Predicated region
        $region41: #{_mm_padded.1} parent=31 // pred_check
          %p298 = pneg %p123
        $region42: #{_mm_padded.1} parent=31 // pred_check_branch
          %300 = sbr.rel (%p298) target = $region44
        $region43: #{_mm_padded.1} parent=31 // pred_region
          %301 = dma.done [#allocation6], 16
        $region44: #{_mm_padded.1} parent=31 // pred_fallthru
          _
        %s302 = sand.u32 %s56, 1
        %s303 = scalar_lea.sflag [#allocation3], %s302
        %s304 = sand.u32 %s56, 1
        %s305 = smul.addr %s304, 256
        %s306 = scalar_lea.vmem [#allocation2], %s305
        %p307 = pneg %p69
        %p308 = pneg %p66
        %p309 = pneg %p97
        %p310 = pneg %p94
        %p311 = pneg %p123
        %p312 = pneg %p120
        %p313 = pneg %p151
        %p314 = pneg %p148
        %s315 = sand.u32 %s138, 1
        %s316 = scalar_lea.sflag [#allocation4], %s315
        %s317 = sand.u32 %s138, 1
        %s318 = smul.addr %s317, 512
        %s319 = scalar_lea.vmem [#allocation8], %s318
        %p320 = pneg %p179
        %p321 = pneg %p176
        %s322 = sand.u32 %s27, 1
        %s323 = scalar_lea.sflag [#allocation10], %s322
        %s324 = sand.u32 %s166, 1
        %s325 = smul.addr %s324, 8
        %s326 = scalar_lea.vmem [#allocation9], %s325
        %p327 = pneg %p207
        %p328 = pneg %p204
        %s329 = sand.u32 %s27, 1
        %s330 = scalar_lea.sflag [#allocation10], %s329
        %s331 = sand.u32 %s194, 1
        %s332 = smul.addr %s331, 8
        %s333 = scalar_lea.vmem [#allocation11], %s332
        %s334 = smul.u32 64, %s33
        %s335 = smul.u32 16, %s34
        %s336 = smul.u32 64, %s33
        %v338 = vld [vmem:[%s289] sm:$0xf]
        %v339 = vld [vmem:[%s289 + $0x4] sm:$0xf]
        %v340 = vld [vmem:[%s289 + $0x8] sm:$0xf]
        %v341 = vld [vmem:[%s289 + $0xc] sm:$0xf]
        %v342 = vld [vmem:[%s289 + $0x10] sm:$0xf]
        %v343 = vld [vmem:[%s289 + $0x14] sm:$0xf]
        %v344 = vld [vmem:[%s289 + $0x18] sm:$0xf]
        %v345 = vld [vmem:[%s289 + $0x1c] sm:$0xf]
        %v346 = vld [vmem:[%s289 + $0x20] sm:$0xf]
        %v347 = vld [vmem:[%s289 + $0x24] sm:$0xf]
        %v348 = vld [vmem:[%s289 + $0x28] sm:$0xf]
        %v349 = vld [vmem:[%s289 + $0x2c] sm:$0xf]
        %v350 = vld [vmem:[%s289 + $0x30] sm:$0xf]
        %v351 = vld [vmem:[%s289 + $0x34] sm:$0xf]
        %v352 = vld [vmem:[%s289 + $0x38] sm:$0xf]
        %v353 = vld [vmem:[%s289 + $0x3c] sm:$0xf]
        %v354 = vld [vmem:[%s289 + $0x40] sm:$0xf]
        %v355 = vld [vmem:[%s289 + $0x44] sm:$0xf]
        %v356 = vld [vmem:[%s289 + $0x48] sm:$0xf]
        %v357 = vld [vmem:[%s289 + $0x4c] sm:$0xf]
        %v358 = vld [vmem:[%s289 + $0x50] sm:$0xf]
        %v359 = vld [vmem:[%s289 + $0x54] sm:$0xf]
        %v360 = vld [vmem:[%s289 + $0x58] sm:$0xf]
        %v361 = vld [vmem:[%s289 + $0x5c] sm:$0xf]
        %v362 = vld [vmem:[%s289 + $0x60] sm:$0xf]
        %v363 = vld [vmem:[%s289 + $0x64] sm:$0xf]
        %v364 = vld [vmem:[%s289 + $0x68] sm:$0xf]
        %v365 = vld [vmem:[%s289 + $0x6c] sm:$0xf]
        %v366 = vld [vmem:[%s289 + $0x70] sm:$0xf]
        %v367 = vld [vmem:[%s289 + $0x74] sm:$0xf]
        %v368 = vld [vmem:[%s289 + $0x78] sm:$0xf]
        %v369 = vld [vmem:[%s289 + $0x7c] sm:$0xf]
        %v370 = vld [vmem:[%s289 + $0x80] sm:$0xf]
        %v371 = vld [vmem:[%s289 + $0x84] sm:$0xf]
        %v372 = vld [vmem:[%s289 + $0x88] sm:$0xf]
        %v373 = vld [vmem:[%s289 + $0x8c] sm:$0xf]
        %v374 = vld [vmem:[%s289 + $0x90] sm:$0xf]
        %v375 = vld [vmem:[%s289 + $0x94] sm:$0xf]
        %v376 = vld [vmem:[%s289 + $0x98] sm:$0xf]
        %v377 = vld [vmem:[%s289 + $0x9c] sm:$0xf]
        %v378 = vld [vmem:[%s289 + $0xa0] sm:$0xf]
        %v379 = vld [vmem:[%s289 + $0xa4] sm:$0xf]
        %v380 = vld [vmem:[%s289 + $0xa8] sm:$0xf]
        %v381 = vld [vmem:[%s289 + $0xac] sm:$0xf]
        %v382 = vld [vmem:[%s289 + $0xb0] sm:$0xf]
        %v383 = vld [vmem:[%s289 + $0xb4] sm:$0xf]
        %v384 = vld [vmem:[%s289 + $0xb8] sm:$0xf]
        %v385 = vld [vmem:[%s289 + $0xbc] sm:$0xf]
        %v386 = vld [vmem:[%s289 + $0xc0] sm:$0xf]
        %v387 = vld [vmem:[%s289 + $0xc4] sm:$0xf]
        %v388 = vld [vmem:[%s289 + $0xc8] sm:$0xf]
        %v389 = vld [vmem:[%s289 + $0xcc] sm:$0xf]
        %v390 = vld [vmem:[%s289 + $0xd0] sm:$0xf]
        %v391 = vld [vmem:[%s289 + $0xd4] sm:$0xf]
        %v392 = vld [vmem:[%s289 + $0xd8] sm:$0xf]
        %v393 = vld [vmem:[%s289 + $0xdc] sm:$0xf]
        %v394 = vld [vmem:[%s289 + $0xe0] sm:$0xf]
        %v395 = vld [vmem:[%s289 + $0xe4] sm:$0xf]
        %v396 = vld [vmem:[%s289 + $0xe8] sm:$0xf]
        %v397 = vld [vmem:[%s289 + $0xec] sm:$0xf]
        %v398 = vld [vmem:[%s289 + $0xf0] sm:$0xf]
        %v399 = vld [vmem:[%s289 + $0xf4] sm:$0xf]
        %v400 = vld [vmem:[%s289 + $0xf8] sm:$0xf]
        %v401 = vld [vmem:[%s289 + $0xfc] sm:$0xf]
        %v402 = vld [vmem:[#allocation5] sm:$0xf]
        %v403 = vld [vmem:[#allocation5 + $0x4] sm:$0xf]
        %v404 = vld [vmem:[#allocation5 + $0x8] sm:$0xf]
        %v405 = vld [vmem:[#allocation5 + $0xc] sm:$0xf]
        %v406 = vld [vmem:[#allocation5 + $0x10] sm:$0xf]
        %v407 = vld [vmem:[#allocation5 + $0x14] sm:$0xf]
        %v408 = vld [vmem:[#allocation5 + $0x18] sm:$0xf]
        %v409 = vld [vmem:[#allocation5 + $0x1c] sm:$0xf]
        %v410 = vld [vmem:[#allocation5 + $0x20] sm:$0xf]
        %v411 = vld [vmem:[#allocation5 + $0x24] sm:$0xf]
        %v412 = vld [vmem:[#allocation5 + $0x28] sm:$0xf]
        %v413 = vld [vmem:[#allocation5 + $0x2c] sm:$0xf]
        %v414 = vld [vmem:[#allocation5 + $0x30] sm:$0xf]
        %v415 = vld [vmem:[#allocation5 + $0x34] sm:$0xf]
        %v416 = vld [vmem:[#allocation5 + $0x38] sm:$0xf]
        %v417 = vld [vmem:[#allocation5 + $0x3c] sm:$0xf]
        %v418 = vld [vmem:[#allocation7] sm:$0x1]
        %v420 = vlaneseq
        %v421 = vshrl.u32 %v420, 7
        %v422 = vsub.s32 0, %v421
        %v423 = vrot.slane %v418, %v422
        %v489 = vunpack.c.l.b16 %v338
        %v490 = vunpack.c.l.b16 %v339
        %v491 = vunpack.c.l.b16 %v340
        %v492 = vunpack.c.l.b16 %v341
        %v493 = vunpack.c.l.b16 %v342
        %v494 = vunpack.c.l.b16 %v343
        %v495 = vunpack.c.l.b16 %v344
        %v496 = vunpack.c.l.b16 %v345
        %v497 = vunpack.c.l.b16 %v346
        %v498 = vunpack.c.l.b16 %v347
        %v499 = vunpack.c.l.b16 %v348
        %v500 = vunpack.c.l.b16 %v349
        %v501 = vunpack.c.l.b16 %v350
        %v502 = vunpack.c.l.b16 %v351
        %v503 = vunpack.c.l.b16 %v352
        %v504 = vunpack.c.l.b16 %v353
        %v505 = vunpack.c.l.b16 %v354
        %v506 = vunpack.c.l.b16 %v355
        %v507 = vunpack.c.l.b16 %v356
        %v508 = vunpack.c.l.b16 %v357
        %v509 = vunpack.c.l.b16 %v358
        %v510 = vunpack.c.l.b16 %v359
        %v511 = vunpack.c.l.b16 %v360
        %v512 = vunpack.c.l.b16 %v361
        %v513 = vunpack.c.l.b16 %v362
        %v514 = vunpack.c.l.b16 %v363
        %v515 = vunpack.c.l.b16 %v364
        %v516 = vunpack.c.l.b16 %v365
        %v517 = vunpack.c.l.b16 %v366
        %v518 = vunpack.c.l.b16 %v367
        %v519 = vunpack.c.l.b16 %v368
        %v520 = vunpack.c.l.b16 %v369
        %v521 = vunpack.c.l.b16 %v370
        %v522 = vunpack.c.l.b16 %v371
        %v523 = vunpack.c.l.b16 %v372
        %v524 = vunpack.c.l.b16 %v373
        %v525 = vunpack.c.l.b16 %v374
        %v526 = vunpack.c.l.b16 %v375
        %v527 = vunpack.c.l.b16 %v376
        %v528 = vunpack.c.l.b16 %v377
        %v529 = vunpack.c.l.b16 %v378
        %v530 = vunpack.c.l.b16 %v379
        %v531 = vunpack.c.l.b16 %v380
        %v532 = vunpack.c.l.b16 %v381
        %v533 = vunpack.c.l.b16 %v382
        %v534 = vunpack.c.l.b16 %v383
        %v535 = vunpack.c.l.b16 %v384
        %v536 = vunpack.c.l.b16 %v385
        %v537 = vunpack.c.l.b16 %v386
        %v538 = vunpack.c.l.b16 %v387
        %v539 = vunpack.c.l.b16 %v388
        %v540 = vunpack.c.l.b16 %v389
        %v541 = vunpack.c.l.b16 %v390
        %v542 = vunpack.c.l.b16 %v391
        %v543 = vunpack.c.l.b16 %v392
        %v544 = vunpack.c.l.b16 %v393
        %v545 = vunpack.c.l.b16 %v394
        %v546 = vunpack.c.l.b16 %v395
        %v547 = vunpack.c.l.b16 %v396
        %v548 = vunpack.c.l.b16 %v397
        %v549 = vunpack.c.l.b16 %v398
        %v550 = vunpack.c.l.b16 %v399
        %v551 = vunpack.c.l.b16 %v400
        %v552 = vunpack.c.l.b16 %v401
        %v553 = vpack.c.b16 %v490, %v489
        %v554 = vpack.c.b16 %v492, %v491
        %v555 = vpack.c.b16 %v494, %v493
        %v556 = vpack.c.b16 %v496, %v495
        %v557 = vpack.c.b16 %v498, %v497
        %v558 = vpack.c.b16 %v500, %v499
        %v559 = vpack.c.b16 %v502, %v501
        %v560 = vpack.c.b16 %v504, %v503
        %v561 = vpack.c.b16 %v506, %v505
        %v562 = vpack.c.b16 %v508, %v507
        %v563 = vpack.c.b16 %v510, %v509
        %v564 = vpack.c.b16 %v512, %v511
        %v565 = vpack.c.b16 %v514, %v513
        %v566 = vpack.c.b16 %v516, %v515
        %v567 = vpack.c.b16 %v518, %v517
        %v568 = vpack.c.b16 %v520, %v519
        %v569 = vpack.c.b16 %v522, %v521
        %v570 = vpack.c.b16 %v524, %v523
        %v571 = vpack.c.b16 %v526, %v525
        %v572 = vpack.c.b16 %v528, %v527
        %v573 = vpack.c.b16 %v530, %v529
        %v574 = vpack.c.b16 %v532, %v531
        %v575 = vpack.c.b16 %v534, %v533
        %v576 = vpack.c.b16 %v536, %v535
        %v577 = vpack.c.b16 %v538, %v537
        %v578 = vpack.c.b16 %v540, %v539
        %v579 = vpack.c.b16 %v542, %v541
        %v580 = vpack.c.b16 %v544, %v543
        %v581 = vpack.c.b16 %v546, %v545
        %v582 = vpack.c.b16 %v548, %v547
        %v583 = vpack.c.b16 %v550, %v549
        %v584 = vpack.c.b16 %v552, %v551
        %v633 = vunpack.c.l.b16 %v402
        %v634 = vunpack.c.l.b16 %v403
        %v635 = vunpack.c.l.b16 %v404
        %v636 = vunpack.c.l.b16 %v405
        %v637 = vunpack.c.l.b16 %v406
        %v638 = vunpack.c.l.b16 %v407
        %v639 = vunpack.c.l.b16 %v408
        %v640 = vunpack.c.l.b16 %v409
        %v641 = vunpack.c.l.b16 %v410
        %v642 = vunpack.c.l.b16 %v411
        %v643 = vunpack.c.l.b16 %v412
        %v644 = vunpack.c.l.b16 %v413
        %v645 = vunpack.c.l.b16 %v414
        %v646 = vunpack.c.l.b16 %v415
        %v647 = vunpack.c.l.b16 %v416
        %v648 = vunpack.c.l.b16 %v417
        %v649 = vpack.c.b16 %v634, %v633
        %v650 = vpack.c.b16 %v636, %v635
        %v651 = vpack.c.b16 %v638, %v637
        %v652 = vpack.c.b16 %v640, %v639
        %v653 = vpack.c.b16 %v642, %v641
        %v654 = vpack.c.b16 %v644, %v643
        %v655 = vpack.c.b16 %v646, %v645
        %v656 = vpack.c.b16 %v648, %v647
        %665 = vmatprep.subr.bf16.mxu0 0
        %666 = vmatpush1.bf16.msra.mxu0 %v649
        %667 = vmatprep.subr.bf16.mxu0 0
        %668 = vmatpush1.bf16.msra.mxu0 %v650
        %669 = vmatprep.subr.bf16.mxu0 0
        %670 = vmatpush1.bf16.msra.mxu0 %v651
        %671 = vmatprep.subr.bf16.mxu0 0
        %672 = vmatpush1.bf16.msra.mxu0 %v652
        %673 = vmatprep.subr.bf16.mxu0 0
        %674 = vmatpush1.bf16.msra.mxu0 %v653
        %675 = vmatprep.subr.bf16.mxu0 0
        %676 = vmatpush1.bf16.msra.mxu0 %v654
        %677 = vmatprep.subr.bf16.mxu0 0
        %678 = vmatpush1.bf16.msra.mxu0 %v655
        %679 = vmatprep.subr.bf16.mxu0 0
        %680 = vmatpush1.bf16.msra.mxu0 %v656
        %681 = vmatprep.subr.bf16.mxu0 0
        %682 = vmatpush1.bf16.msra.mxu0 0
        %683 = vmatprep.subr.bf16.mxu0 0
        %684 = vmatpush1.bf16.msra.mxu0 0
        %685 = vmatprep.subr.bf16.mxu0 0
        %686 = vmatpush1.bf16.msra.mxu0 0
        %687 = vmatprep.subr.bf16.mxu0 0
        %688 = vmatpush1.bf16.msra.mxu0 0
        %689 = vmatprep.subr.bf16.mxu0 0
        %690 = vmatpush1.bf16.msra.mxu0 0
        %691 = vmatprep.subr.bf16.mxu0 0
        %692 = vmatpush1.bf16.msra.mxu0 0
        %693 = vmatprep.subr.bf16.mxu0 0
        %694 = vmatpush1.bf16.msra.mxu0 0
        %695 = vmatprep.subr.bf16.mxu0 0
        %696 = vmatpush1.bf16.msra.mxu0 0
        %697 = vmatprep.mubr.bf16.mxu0 0
        %698 = vmatmul.mubr.bf16.gmra.mrb[0].mxu0 %v553
        %v699 = vpop.f32.mrb[0].mxu0
        %v700 = vadd.f32 %v423, %v699
        %v701 = vpop.f32.mrb[0].mxu0
        %v702 = vpop.f32.mrb[0].mxu0
        %v703 = vadd.f32 %v423, %v702
        %v704 = vpop.f32.mrb[0].mxu0
        %705 = vmatprep.mubr.bf16.mxu0 0
        %706 = vmatmul.mubr.bf16.gmra.mrb[0].mxu0 %v554
        %v707 = vpop.f32.mrb[0].mxu0
        %v708 = vadd.f32 %v423, %v707
        %v709 = vpop.f32.mrb[0].mxu0
        %v710 = vpop.f32.mrb[0].mxu0
        %v711 = vadd.f32 %v423, %v710
        %v712 = vpop.f32.mrb[0].mxu0
        %713 = vmatprep.mubr.bf16.mxu0 0
        %714 = vmatmul.mubr.bf16.gmra.mrb[0].mxu0 %v555
        %v715 = vpop.f32.mrb[0].mxu0
        %v716 = vadd.f32 %v423, %v715
        %v717 = vpop.f32.mrb[0].mxu0
        %v718 = vpop.f32.mrb[0].mxu0
        %v719 = vadd.f32 %v423, %v718
        %v720 = vpop.f32.mrb[0].mxu0
        %721 = vmatprep.mubr.bf16.mxu0 0
        %722 = vmatmul.mubr.bf16.gmra.mrb[0].mxu0 %v556
        %v723 = vpop.f32.mrb[0].mxu0
        %v724 = vadd.f32 %v423, %v723
        %v725 = vpop.f32.mrb[0].mxu0
        %v726 = vpop.f32.mrb[0].mxu0
        %v727 = vadd.f32 %v423, %v726
        %v728 = vpop.f32.mrb[0].mxu0
        %729 = vmatprep.mubr.bf16.mxu0 0
        %730 = vmatmul.mubr.bf16.gmra.mrb[0].mxu0 %v557
        %v731 = vpop.f32.mrb[0].mxu0
        %v732 = vadd.f32 %v423, %v731
        %v733 = vpop.f32.mrb[0].mxu0
        %v734 = vpop.f32.mrb[0].mxu0
        %v735 = vadd.f32 %v423, %v734
        %v736 = vpop.f32.mrb[0].mxu0
        %737 = vmatprep.mubr.bf16.mxu0 0
        %738 = vmatmul.mubr.bf16.gmra.mrb[0].mxu0 %v558
        %v739 = vpop.f32.mrb[0].mxu0
        %v740 = vadd.f32 %v423, %v739
        %v741 = vpop.f32.mrb[0].mxu0
        %v742 = vpop.f32.mrb[0].mxu0
        %v743 = vadd.f32 %v423, %v742
        %v744 = vpop.f32.mrb[0].mxu0
        %745 = vmatprep.mubr.bf16.mxu0 0
        %746 = vmatmul.mubr.bf16.gmra.mrb[0].mxu0 %v559
        %v747 = vpop.f32.mrb[0].mxu0
        %v748 = vadd.f32 %v423, %v747
        %v749 = vpop.f32.mrb[0].mxu0
        %v750 = vpop.f32.mrb[0].mxu0
        %v751 = vadd.f32 %v423, %v750
        %v752 = vpop.f32.mrb[0].mxu0
        %753 = vmatprep.mubr.bf16.mxu0 0
        %754 = vmatmul.mubr.bf16.gmra.mrb[0].mxu0 %v560
        %v755 = vpop.f32.mrb[0].mxu0
        %v756 = vadd.f32 %v423, %v755
        %v757 = vpop.f32.mrb[0].mxu0
        %v758 = vpop.f32.mrb[0].mxu0
        %v759 = vadd.f32 %v423, %v758
        %v760 = vpop.f32.mrb[0].mxu0
        %761 = vmatprep.mubr.bf16.mxu0 0
        %762 = vmatmul.mubr.bf16.gmra.mrb[0].mxu0 %v561
        %v763 = vpop.f32.mrb[0].mxu0
        %v764 = vadd.f32 %v423, %v763
        %v765 = vpop.f32.mrb[0].mxu0
        %v766 = vpop.f32.mrb[0].mxu0
        %v767 = vadd.f32 %v423, %v766
        %v768 = vpop.f32.mrb[0].mxu0
        %769 = vmatprep.mubr.bf16.mxu0 0
        %770 = vmatmul.mubr.bf16.gmra.mrb[0].mxu0 %v562
        %v771 = vpop.f32.mrb[0].mxu0
        %v772 = vadd.f32 %v423, %v771
        %v773 = vpop.f32.mrb[0].mxu0
        %v774 = vpop.f32.mrb[0].mxu0
        %v775 = vadd.f32 %v423, %v774
        %v776 = vpop.f32.mrb[0].mxu0
        %777 = vmatprep.mubr.bf16.mxu0 0
        %778 = vmatmul.mubr.bf16.gmra.mrb[0].mxu0 %v563
        %v779 = vpop.f32.mrb[0].mxu0
        %v780 = vadd.f32 %v423, %v779
        %v781 = vpop.f32.mrb[0].mxu0
        %v782 = vpop.f32.mrb[0].mxu0
        %v783 = vadd.f32 %v423, %v782
        %v784 = vpop.f32.mrb[0].mxu0
        %785 = vmatprep.mubr.bf16.mxu0 0
        %786 = vmatmul.mubr.bf16.gmra.mrb[0].mxu0 %v564
        %v787 = vpop.f32.mrb[0].mxu0
        %v788 = vadd.f32 %v423, %v787
        %v789 = vpop.f32.mrb[0].mxu0
        %v790 = vpop.f32.mrb[0].mxu0
        %v791 = vadd.f32 %v423, %v790
        %v792 = vpop.f32.mrb[0].mxu0
        %793 = vmatprep.mubr.bf16.mxu0 0
        %794 = vmatmul.mubr.bf16.gmra.mrb[0].mxu0 %v565
        %v795 = vpop.f32.mrb[0].mxu0
        %v796 = vadd.f32 %v423, %v795
        %v797 = vpop.f32.mrb[0].mxu0
        %v798 = vpop.f32.mrb[0].mxu0
        %v799 = vadd.f32 %v423, %v798
        %v800 = vpop.f32.mrb[0].mxu0
        %801 = vmatprep.mubr.bf16.mxu0 0
        %802 = vmatmul.mubr.bf16.gmra.mrb[0].mxu0 %v566
        %v803 = vpop.f32.mrb[0].mxu0
        %v804 = vadd.f32 %v423, %v803
        %v805 = vpop.f32.mrb[0].mxu0
        %v806 = vpop.f32.mrb[0].mxu0
        %v807 = vadd.f32 %v423, %v806
        %v808 = vpop.f32.mrb[0].mxu0
        %809 = vmatprep.mubr.bf16.mxu0 0
        %810 = vmatmul.mubr.bf16.gmra.mrb[0].mxu0 %v567
        %v811 = vpop.f32.mrb[0].mxu0
        %v812 = vadd.f32 %v423, %v811
        %v813 = vpop.f32.mrb[0].mxu0
        %v814 = vpop.f32.mrb[0].mxu0
        %v815 = vadd.f32 %v423, %v814
        %v816 = vpop.f32.mrb[0].mxu0
        %817 = vmatprep.mubr.bf16.mxu0 0
        %818 = vmatmul.mubr.bf16.gmra.mrb[0].mxu0 %v568
        %v819 = vpop.f32.mrb[0].mxu0
        %v820 = vadd.f32 %v423, %v819
        %v821 = vpop.f32.mrb[0].mxu0
        %v822 = vpop.f32.mrb[0].mxu0
        %v823 = vadd.f32 %v423, %v822
        %v824 = vpop.f32.mrb[0].mxu0
        %825 = vmatprep.mubr.bf16.mxu0 0
        %826 = vmatmul.mubr.bf16.gmra.mrb[0].mxu0 %v569
        %v827 = vpop.f32.mrb[0].mxu0
        %v828 = vadd.f32 %v423, %v827
        %v829 = vpop.f32.mrb[0].mxu0
        %v830 = vpop.f32.mrb[0].mxu0
        %v831 = vadd.f32 %v423, %v830
        %v832 = vpop.f32.mrb[0].mxu0
        %833 = vmatprep.mubr.bf16.mxu0 0
        %834 = vmatmul.mubr.bf16.gmra.mrb[0].mxu0 %v570
        %v835 = vpop.f32.mrb[0].mxu0
        %v836 = vadd.f32 %v423, %v835
        %v837 = vpop.f32.mrb[0].mxu0
        %v838 = vpop.f32.mrb[0].mxu0
        %v839 = vadd.f32 %v423, %v838
        %v840 = vpop.f32.mrb[0].mxu0
        %841 = vmatprep.mubr.bf16.mxu0 0
        %842 = vmatmul.mubr.bf16.gmra.mrb[0].mxu0 %v571
        %v843 = vpop.f32.mrb[0].mxu0
        %v844 = vadd.f32 %v423, %v843
        %v845 = vpop.f32.mrb[0].mxu0
        %v846 = vpop.f32.mrb[0].mxu0
        %v847 = vadd.f32 %v423, %v846
        %v848 = vpop.f32.mrb[0].mxu0
        %849 = vmatprep.mubr.bf16.mxu0 0
        %850 = vmatmul.mubr.bf16.gmra.mrb[0].mxu0 %v572
        %v851 = vpop.f32.mrb[0].mxu0
        %v852 = vadd.f32 %v423, %v851
        %v853 = vpop.f32.mrb[0].mxu0
        %v854 = vpop.f32.mrb[0].mxu0
        %v855 = vadd.f32 %v423, %v854
        %v856 = vpop.f32.mrb[0].mxu0
        %857 = vmatprep.mubr.bf16.mxu0 0
        %858 = vmatmul.mubr.bf16.gmra.mrb[0].mxu0 %v573
        %v859 = vpop.f32.mrb[0].mxu0
        %v860 = vadd.f32 %v423, %v859
        %v861 = vpop.f32.mrb[0].mxu0
        %v862 = vpop.f32.mrb[0].mxu0
        %v863 = vadd.f32 %v423, %v862
        %v864 = vpop.f32.mrb[0].mxu0
        %865 = vmatprep.mubr.bf16.mxu0 0
        %866 = vmatmul.mubr.bf16.gmra.mrb[0].mxu0 %v574
        %v867 = vpop.f32.mrb[0].mxu0
        %v868 = vadd.f32 %v423, %v867
        %v869 = vpop.f32.mrb[0].mxu0
        %v870 = vpop.f32.mrb[0].mxu0
        %v871 = vadd.f32 %v423, %v870
        %v872 = vpop.f32.mrb[0].mxu0
        %873 = vmatprep.mubr.bf16.mxu0 0
        %874 = vmatmul.mubr.bf16.gmra.mrb[0].mxu0 %v575
        %v875 = vpop.f32.mrb[0].mxu0
        %v876 = vadd.f32 %v423, %v875
        %v877 = vpop.f32.mrb[0].mxu0
        %v878 = vpop.f32.mrb[0].mxu0
        %v879 = vadd.f32 %v423, %v878
        %v880 = vpop.f32.mrb[0].mxu0
        %881 = vmatprep.mubr.bf16.mxu0 0
        %882 = vmatmul.mubr.bf16.gmra.mrb[0].mxu0 %v576
        %v883 = vpop.f32.mrb[0].mxu0
        %v884 = vadd.f32 %v423, %v883
        %v885 = vpop.f32.mrb[0].mxu0
        %v886 = vpop.f32.mrb[0].mxu0
        %v887 = vadd.f32 %v423, %v886
        %v888 = vpop.f32.mrb[0].mxu0
        %889 = vmatprep.mubr.bf16.mxu0 0
        %890 = vmatmul.mubr.bf16.gmra.mrb[0].mxu0 %v577
        %v891 = vpop.f32.mrb[0].mxu0
        %v892 = vadd.f32 %v423, %v891
        %v893 = vpop.f32.mrb[0].mxu0
        %v894 = vpop.f32.mrb[0].mxu0
        %v895 = vadd.f32 %v423, %v894
        %v896 = vpop.f32.mrb[0].mxu0
        %897 = vmatprep.mubr.bf16.mxu0 0
        %898 = vmatmul.mubr.bf16.gmra.mrb[0].mxu0 %v578
        %v899 = vpop.f32.mrb[0].mxu0
        %v900 = vadd.f32 %v423, %v899
        %v901 = vpop.f32.mrb[0].mxu0
        %v902 = vpop.f32.mrb[0].mxu0
        %v903 = vadd.f32 %v423, %v902
        %v904 = vpop.f32.mrb[0].mxu0
        %905 = vmatprep.mubr.bf16.mxu0 0
        %906 = vmatmul.mubr.bf16.gmra.mrb[0].mxu0 %v579
        %v907 = vpop.f32.mrb[0].mxu0
        %v908 = vadd.f32 %v423, %v907
        %v909 = vpop.f32.mrb[0].mxu0
        %v910 = vpop.f32.mrb[0].mxu0
        %v911 = vadd.f32 %v423, %v910
        %v912 = vpop.f32.mrb[0].mxu0
        %913 = vmatprep.mubr.bf16.mxu0 0
        %914 = vmatmul.mubr.bf16.gmra.mrb[0].mxu0 %v580
        %v915 = vpop.f32.mrb[0].mxu0
        %v916 = vadd.f32 %v423, %v915
        %v917 = vpop.f32.mrb[0].mxu0
        %v918 = vpop.f32.mrb[0].mxu0
        %v919 = vadd.f32 %v423, %v918
        %v920 = vpop.f32.mrb[0].mxu0
        %921 = vmatprep.mubr.bf16.mxu0 0
        %922 = vmatmul.mubr.bf16.gmra.mrb[0].mxu0 %v581
        %v923 = vpop.f32.mrb[0].mxu0
        %v924 = vadd.f32 %v423, %v923
        %v925 = vpop.f32.mrb[0].mxu0
        %v926 = vpop.f32.mrb[0].mxu0
        %v927 = vadd.f32 %v423, %v926
        %v928 = vpop.f32.mrb[0].mxu0
        %929 = vmatprep.mubr.bf16.mxu0 0
        %930 = vmatmul.mubr.bf16.gmra.mrb[0].mxu0 %v582
        %v931 = vpop.f32.mrb[0].mxu0
        %v932 = vadd.f32 %v423, %v931
        %v933 = vpop.f32.mrb[0].mxu0
        %v934 = vpop.f32.mrb[0].mxu0
        %v935 = vadd.f32 %v423, %v934
        %v936 = vpop.f32.mrb[0].mxu0
        %937 = vmatprep.mubr.bf16.mxu0 0
        %938 = vmatmul.mubr.bf16.gmra.mrb[0].mxu0 %v583
        %v939 = vpop.f32.mrb[0].mxu0
        %v940 = vadd.f32 %v423, %v939
        %v941 = vpop.f32.mrb[0].mxu0
        %v942 = vpop.f32.mrb[0].mxu0
        %v943 = vadd.f32 %v423, %v942
        %v944 = vpop.f32.mrb[0].mxu0
        %945 = vmatprep.mubr.bf16.mxu0 0
        %946 = vmatmul.mubr.bf16.gmra.mrb[0].mxu0 %v584
        %v947 = vpop.f32.mrb[0].mxu0
        %v948 = vadd.f32 %v423, %v947
        %v949 = vpop.f32.mrb[0].mxu0
        %v950 = vpop.f32.mrb[0].mxu0
        %v951 = vadd.f32 %v423, %v950
        %v952 = vpop.f32.mrb[0].mxu0
        %953 = vdwg.mxu0
        %954 = vst [vmem:[%s319] sm:$0xff] %v700
        %955 = vst [vmem:[%s319 + $0x8] sm:$0xff] %v703
        %956 = vst [vmem:[%s319 + $0x10] sm:$0xff] %v708
        %957 = vst [vmem:[%s319 + $0x18] sm:$0xff] %v711
        %958 = vst [vmem:[%s319 + $0x20] sm:$0xff] %v716
        %959 = vst [vmem:[%s319 + $0x28] sm:$0xff] %v719
        %960 = vst [vmem:[%s319 + $0x30] sm:$0xff] %v724
        %961 = vst [vmem:[%s319 + $0x38] sm:$0xff] %v727
        %962 = vst [vmem:[%s319 + $0x40] sm:$0xff] %v732
        %963 = vst [vmem:[%s319 + $0x48] sm:$0xff] %v735
        %964 = vst [vmem:[%s319 + $0x50] sm:$0xff] %v740
        %965 = vst [vmem:[%s319 + $0x58] sm:$0xff] %v743
        %966 = vst [vmem:[%s319 + $0x60] sm:$0xff] %v748
        %967 = vst [vmem:[%s319 + $0x68] sm:$0xff] %v751
        %968 = vst [vmem:[%s319 + $0x70] sm:$0xff] %v756
        %969 = vst [vmem:[%s319 + $0x78] sm:$0xff] %v759
        %970 = vst [vmem:[%s319 + $0x80] sm:$0xff] %v764
        %971 = vst [vmem:[%s319 + $0x88] sm:$0xff] %v767
        %972 = vst [vmem:[%s319 + $0x90] sm:$0xff] %v772
        %973 = vst [vmem:[%s319 + $0x98] sm:$0xff] %v775
        %974 = vst [vmem:[%s319 + $0xa0] sm:$0xff] %v780
        %975 = vst [vmem:[%s319 + $0xa8] sm:$0xff] %v783
        %976 = vst [vmem:[%s319 + $0xb0] sm:$0xff] %v788
        %977 = vst [vmem:[%s319 + $0xb8] sm:$0xff] %v791
        %978 = vst [vmem:[%s319 + $0xc0] sm:$0xff] %v796
        %979 = vst [vmem:[%s319 + $0xc8] sm:$0xff] %v799
        %980 = vst [vmem:[%s319 + $0xd0] sm:$0xff] %v804
        %981 = vst [vmem:[%s319 + $0xd8] sm:$0xff] %v807
        %982 = vst [vmem:[%s319 + $0xe0] sm:$0xff] %v812
        %983 = vst [vmem:[%s319 + $0xe8] sm:$0xff] %v815
        %984 = vst [vmem:[%s319 + $0xf0] sm:$0xff] %v820
        %985 = vst [vmem:[%s319 + $0xf8] sm:$0xff] %v823
        %986 = vst [vmem:[%s319 + $0x100] sm:$0xff] %v828
        %987 = vst [vmem:[%s319 + $0x108] sm:$0xff] %v831
        %988 = vst [vmem:[%s319 + $0x110] sm:$0xff] %v836
        %989 = vst [vmem:[%s319 + $0x118] sm:$0xff] %v839
        %990 = vst [vmem:[%s319 + $0x120] sm:$0xff] %v844
        %991 = vst [vmem:[%s319 + $0x128] sm:$0xff] %v847
        %992 = vst [vmem:[%s319 + $0x130] sm:$0xff] %v852
        %993 = vst [vmem:[%s319 + $0x138] sm:$0xff] %v855
        %994 = vst [vmem:[%s319 + $0x140] sm:$0xff] %v860
        %995 = vst [vmem:[%s319 + $0x148] sm:$0xff] %v863
        %996 = vst [vmem:[%s319 + $0x150] sm:$0xff] %v868
        %997 = vst [vmem:[%s319 + $0x158] sm:$0xff] %v871
        %998 = vst [vmem:[%s319 + $0x160] sm:$0xff] %v876
        %999 = vst [vmem:[%s319 + $0x168] sm:$0xff] %v879
        %1000 = vst [vmem:[%s319 + $0x170] sm:$0xff] %v884
        %1001 = vst [vmem:[%s319 + $0x178] sm:$0xff] %v887
        %1002 = vst [vmem:[%s319 + $0x180] sm:$0xff] %v892
        %1003 = vst [vmem:[%s319 + $0x188] sm:$0xff] %v895
        %1004 = vst [vmem:[%s319 + $0x190] sm:$0xff] %v900
        %1005 = vst [vmem:[%s319 + $0x198] sm:$0xff] %v903
        %1006 = vst [vmem:[%s319 + $0x1a0] sm:$0xff] %v908
        %1007 = vst [vmem:[%s319 + $0x1a8] sm:$0xff] %v911
        %1008 = vst [vmem:[%s319 + $0x1b0] sm:$0xff] %v916
        %1009 = vst [vmem:[%s319 + $0x1b8] sm:$0xff] %v919
        %1010 = vst [vmem:[%s319 + $0x1c0] sm:$0xff] %v924
        %1011 = vst [vmem:[%s319 + $0x1c8] sm:$0xff] %v927
        %1012 = vst [vmem:[%s319 + $0x1d0] sm:$0xff] %v932
        %1013 = vst [vmem:[%s319 + $0x1d8] sm:$0xff] %v935
        %1014 = vst [vmem:[%s319 + $0x1e0] sm:$0xff] %v940
        %1015 = vst [vmem:[%s319 + $0x1e8] sm:$0xff] %v943
        %1016 = vst [vmem:[%s319 + $0x1f0] sm:$0xff] %v948
        %1017 = vst [vmem:[%s319 + $0x1f8] sm:$0xff] %v951
        %v1018 = vadd.f32 %v700, %v703
        %v1019 = vadd.f32 %v1018, %v708
        %v1020 = vadd.f32 %v1019, %v711
        %v1021 = vadd.f32 %v1020, %v716
        %v1022 = vadd.f32 %v1021, %v719
        %v1023 = vadd.f32 %v1022, %v724
        %v1024 = vadd.f32 %v1023, %v727
        %v1025 = vadd.f32 %v1024, %v732
        %v1026 = vadd.f32 %v1025, %v735
        %v1027 = vadd.f32 %v1026, %v740
        %v1028 = vadd.f32 %v1027, %v743
        %v1029 = vadd.f32 %v1028, %v748
        %v1030 = vadd.f32 %v1029, %v751
        %v1031 = vadd.f32 %v1030, %v756
        %v1032 = vadd.f32 %v1031, %v759
        %v1033 = vadd.f32 %v1032, %v764
        %v1034 = vadd.f32 %v1033, %v767
        %v1035 = vadd.f32 %v1034, %v772
        %v1036 = vadd.f32 %v1035, %v775
        %v1037 = vadd.f32 %v1036, %v780
        %v1038 = vadd.f32 %v1037, %v783
        %v1039 = vadd.f32 %v1038, %v788
        %v1040 = vadd.f32 %v1039, %v791
        %v1041 = vadd.f32 %v1040, %v796
        %v1042 = vadd.f32 %v1041, %v799
        %v1043 = vadd.f32 %v1042, %v804
        %v1044 = vadd.f32 %v1043, %v807
        %v1045 = vadd.f32 %v1044, %v812
        %v1046 = vadd.f32 %v1045, %v815
        %v1047 = vadd.f32 %v1046, %v820
        %v1048 = vadd.f32 %v1047, %v823
        %v1049 = vadd.f32 %v1048, %v828
        %v1050 = vadd.f32 %v1049, %v831
        %v1051 = vadd.f32 %v1050, %v836
        %v1052 = vadd.f32 %v1051, %v839
        %v1053 = vadd.f32 %v1052, %v844
        %v1054 = vadd.f32 %v1053, %v847
        %v1055 = vadd.f32 %v1054, %v852
        %v1056 = vadd.f32 %v1055, %v855
        %v1057 = vadd.f32 %v1056, %v860
        %v1058 = vadd.f32 %v1057, %v863
        %v1059 = vadd.f32 %v1058, %v868
        %v1060 = vadd.f32 %v1059, %v871
        %v1061 = vadd.f32 %v1060, %v876
        %v1062 = vadd.f32 %v1061, %v879
        %v1063 = vadd.f32 %v1062, %v884
        %v1064 = vadd.f32 %v1063, %v887
        %v1065 = vadd.f32 %v1064, %v892
        %v1066 = vadd.f32 %v1065, %v895
        %v1067 = vadd.f32 %v1066, %v900
        %v1068 = vadd.f32 %v1067, %v903
        %v1069 = vadd.f32 %v1068, %v908
        %v1070 = vadd.f32 %v1069, %v911
        %v1071 = vadd.f32 %v1070, %v916
        %v1072 = vadd.f32 %v1071, %v919
        %v1073 = vadd.f32 %v1072, %v924
        %v1074 = vadd.f32 %v1073, %v927
        %v1075 = vadd.f32 %v1074, %v932
        %v1076 = vadd.f32 %v1075, %v935
        %v1077 = vadd.f32 %v1076, %v940
        %v1078 = vadd.f32 %v1077, %v943
        %v1079 = vadd.f32 %v1078, %v948
        %v1080 = vadd.f32 %v1079, %v951
        %v1081 = vrot.slane %v1080, 4
        %v1082 = vadd.f32 %v1080, %v1081
        %v1083 = vrot.slane %v1082, 2
        %v1084 = vadd.f32 %v1082, %v1083
        %v1085 = vrot.slane %v1084, 1
        %v1086 = vadd.f32 %v1084, %v1085
        %v1087 = vmul.f32 %v700, %v700
        %v1088 = vmul.f32 %v703, %v703
        %v1089 = vmul.f32 %v708, %v708
        %v1090 = vmul.f32 %v711, %v711
        %v1091 = vmul.f32 %v716, %v716
        %v1092 = vmul.f32 %v719, %v719
        %v1093 = vmul.f32 %v724, %v724
        %v1094 = vmul.f32 %v727, %v727
        %v1095 = vmul.f32 %v732, %v732
        %v1096 = vmul.f32 %v735, %v735
        %v1097 = vmul.f32 %v740, %v740
        %v1098 = vmul.f32 %v743, %v743
        %v1099 = vmul.f32 %v748, %v748
        %v1100 = vmul.f32 %v751, %v751
        %v1101 = vmul.f32 %v756, %v756
        %v1102 = vmul.f32 %v759, %v759
        %v1103 = vmul.f32 %v764, %v764
        %v1104 = vmul.f32 %v767, %v767
        %v1105 = vmul.f32 %v772, %v772
        %v1106 = vmul.f32 %v775, %v775
        %v1107 = vmul.f32 %v780, %v780
        %v1108 = vmul.f32 %v783, %v783
        %v1109 = vmul.f32 %v788, %v788
        %v1110 = vmul.f32 %v791, %v791
        %v1111 = vmul.f32 %v796, %v796
        %v1112 = vmul.f32 %v799, %v799
        %v1113 = vmul.f32 %v804, %v804
        %v1114 = vmul.f32 %v807, %v807
        %v1115 = vmul.f32 %v812, %v812
        %v1116 = vmul.f32 %v815, %v815
        %v1117 = vmul.f32 %v820, %v820
        %v1118 = vmul.f32 %v823, %v823
        %v1119 = vmul.f32 %v828, %v828
        %v1120 = vmul.f32 %v831, %v831
        %v1121 = vmul.f32 %v836, %v836
        %v1122 = vmul.f32 %v839, %v839
        %v1123 = vmul.f32 %v844, %v844
        %v1124 = vmul.f32 %v847, %v847
        %v1125 = vmul.f32 %v852, %v852
        %v1126 = vmul.f32 %v855, %v855
        %v1127 = vmul.f32 %v860, %v860
        %v1128 = vmul.f32 %v863, %v863
        %v1129 = vmul.f32 %v868, %v868
        %v1130 = vmul.f32 %v871, %v871
        %v1131 = vmul.f32 %v876, %v876
        %v1132 = vmul.f32 %v879, %v879
        %v1133 = vmul.f32 %v884, %v884
        %v1134 = vmul.f32 %v887, %v887
        %v1135 = vmul.f32 %v892, %v892
        %v1136 = vmul.f32 %v895, %v895
        %v1137 = vmul.f32 %v900, %v900
        %v1138 = vmul.f32 %v903, %v903
        %v1139 = vmul.f32 %v908, %v908
        %v1140 = vmul.f32 %v911, %v911
        %v1141 = vmul.f32 %v916, %v916
        %v1142 = vmul.f32 %v919, %v919
        %v1143 = vmul.f32 %v924, %v924
        %v1144 = vmul.f32 %v927, %v927
        %v1145 = vmul.f32 %v932, %v932
        %v1146 = vmul.f32 %v935, %v935
        %v1147 = vmul.f32 %v940, %v940
        %v1148 = vmul.f32 %v943, %v943
        %v1149 = vmul.f32 %v948, %v948
        %v1150 = vmul.f32 %v951, %v951
        %v1151 = vadd.f32 %v1087, %v1088
        %v1152 = vadd.f32 %v1151, %v1089
        %v1153 = vadd.f32 %v1152, %v1090
        %v1154 = vadd.f32 %v1153, %v1091
        %v1155 = vadd.f32 %v1154, %v1092
        %v1156 = vadd.f32 %v1155, %v1093
        %v1157 = vadd.f32 %v1156, %v1094
        %v1158 = vadd.f32 %v1157, %v1095
        %v1159 = vadd.f32 %v1158, %v1096
        %v1160 = vadd.f32 %v1159, %v1097
        %v1161 = vadd.f32 %v1160, %v1098
        %v1162 = vadd.f32 %v1161, %v1099
        %v1163 = vadd.f32 %v1162, %v1100
        %v1164 = vadd.f32 %v1163, %v1101
        %v1165 = vadd.f32 %v1164, %v1102
        %v1166 = vadd.f32 %v1165, %v1103
        %v1167 = vadd.f32 %v1166, %v1104
        %v1168 = vadd.f32 %v1167, %v1105
        %v1169 = vadd.f32 %v1168, %v1106
        %v1170 = vadd.f32 %v1169, %v1107
        %v1171 = vadd.f32 %v1170, %v1108
        %v1172 = vadd.f32 %v1171, %v1109
        %v1173 = vadd.f32 %v1172, %v1110
        %v1174 = vadd.f32 %v1173, %v1111
        %v1175 = vadd.f32 %v1174, %v1112
        %v1176 = vadd.f32 %v1175, %v1113
        %v1177 = vadd.f32 %v1176, %v1114
        %v1178 = vadd.f32 %v1177, %v1115
        %v1179 = vadd.f32 %v1178, %v1116
        %v1180 = vadd.f32 %v1179, %v1117
        %v1181 = vadd.f32 %v1180, %v1118
        %v1182 = vadd.f32 %v1181, %v1119
        %v1183 = vadd.f32 %v1182, %v1120
        %v1184 = vadd.f32 %v1183, %v1121
        %v1185 = vadd.f32 %v1184, %v1122
        %v1186 = vadd.f32 %v1185, %v1123
        %v1187 = vadd.f32 %v1186, %v1124
        %v1188 = vadd.f32 %v1187, %v1125
        %v1189 = vadd.f32 %v1188, %v1126
        %v1190 = vadd.f32 %v1189, %v1127
        %v1191 = vadd.f32 %v1190, %v1128
        %v1192 = vadd.f32 %v1191, %v1129
        %v1193 = vadd.f32 %v1192, %v1130
        %v1194 = vadd.f32 %v1193, %v1131
        %v1195 = vadd.f32 %v1194, %v1132
        %v1196 = vadd.f32 %v1195, %v1133
        %v1197 = vadd.f32 %v1196, %v1134
        %v1198 = vadd.f32 %v1197, %v1135
        %v1199 = vadd.f32 %v1198, %v1136
        %v1200 = vadd.f32 %v1199, %v1137
        %v1201 = vadd.f32 %v1200, %v1138
        %v1202 = vadd.f32 %v1201, %v1139
        %v1203 = vadd.f32 %v1202, %v1140
        %v1204 = vadd.f32 %v1203, %v1141
        %v1205 = vadd.f32 %v1204, %v1142
        %v1206 = vadd.f32 %v1205, %v1143
        %v1207 = vadd.f32 %v1206, %v1144
        %v1208 = vadd.f32 %v1207, %v1145
        %v1209 = vadd.f32 %v1208, %v1146
        %v1210 = vadd.f32 %v1209, %v1147
        %v1211 = vadd.f32 %v1210, %v1148
        %v1212 = vadd.f32 %v1211, %v1149
        %v1213 = vadd.f32 %v1212, %v1150
        %v1214 = vrot.slane %v1213, 4
        %v1215 = vadd.f32 %v1213, %v1214
        %v1216 = vrot.slane %v1215, 2
        %v1217 = vadd.f32 %v1215, %v1216
        %v1218 = vrot.slane %v1217, 1
        %v1219 = vadd.f32 %v1217, %v1218
        %1220 = vst [vmem:[%s326] sm:$0xff] %v1086
        %1221 = vst [vmem:[%s333] sm:$0xff] %v1219
        %s1222 = sand.u32 %s138, 1
        %s1223 = scalar_lea.sflag [#allocation4], %s1222
        %s1224 = sand.u32 %s138, 1
        %s1225 = smul.addr %s1224, 512
        %s1226 = scalar_lea.vmem [#allocation8], %s1225
        %s1227 = sand.u32 %s27, 1
        %s1228 = scalar_lea.sflag [#allocation10], %s1227
        %s1229 = sand.u32 %s166, 1
        %s1230 = smul.addr %s1229, 8
        %s1231 = scalar_lea.vmem [#allocation9], %s1230
        %s1232 = sand.u32 %s27, 1
        %s1233 = scalar_lea.sflag [#allocation10], %s1232
        %s1234 = sand.u32 %s194, 1
        %s1235 = smul.addr %s1234, 8
        %s1236 = scalar_lea.vmem [#allocation11], %s1235
        // Predicated region
        $region45: #{_mm_padded.1} parent=31 // pred_check
          %p1237 = pneg %p148
        $region46: #{_mm_padded.1} parent=31 // pred_check_branch
          %1239 = sbr.rel (%p1237) target = $region48
        $region47: #{_mm_padded.1} parent=31 // pred_region
          %s1240 = smul.u32 64, %s33
          %s1242 = ssub.s32 8192, 8192
          %1243 = vsyncadd %s1223, %s1242
          %s1244 = sadd.s32 %s32, %s1240
          %s1245 = smul.addr %s1244, 128
          %s1246 = scalar_lea.hbm %s3, %s1245
          %s1247 = sshll.u32 %s1226, 4
          %s1248 = int_to_ptr.vmem [resolvable:$true] %s1247
          %1253 = dma.vmem_to_hbm [thread:$0]  %s1248, 8192, %s1246, %s1223, 128, 128, 8
        $region48: #{_mm_padded.1} parent=31 // pred_fallthru
          _
        // Predicated region
        $region49: #{_mm_padded.1} parent=31 // pred_check
          %p1254 = pneg %p176
        $region50: #{_mm_padded.1} parent=31 // pred_check_branch
          %1256 = sbr.rel (%p1254) target = $region52
        $region51: #{_mm_padded.1} parent=31 // pred_region
          %s1258 = ssub.s32 128, 128
          %1259 = vsyncadd %s1228, %s1258
          %s1260 = sadd.s32 %s32, %s33
          %s1261 = smul.addr %s1260, 128
          %s1262 = scalar_lea.hbm %s4, %s1261
          %s1264 = sshll.u32 %s1231, 4
          %s1265 = int_to_ptr.vmem [resolvable:$true] %s1264
          %1267 = dma.vmem_to_hbm [thread:$0]  %s1265, 128, %s1262, %s1228
        $region52: #{_mm_padded.1} parent=31 // pred_fallthru
          _
        // Predicated region
        $region53: #{_mm_padded.1} parent=31 // pred_check
          %p1268 = pneg %p204
        $region54: #{_mm_padded.1} parent=31 // pred_check_branch
          %1270 = sbr.rel (%p1268) target = $region56
        $region55: #{_mm_padded.1} parent=31 // pred_region
          %s1272 = ssub.s32 128, 128
          %1273 = vsyncadd %s1233, %s1272
          %s1274 = sadd.s32 %s32, %s33
          %s1275 = smul.addr %s1274, 128
          %s1276 = scalar_lea.hbm %s5, %s1275
          %s1278 = sshll.u32 %s1236, 4
          %s1279 = int_to_ptr.vmem [resolvable:$true] %s1278
          %1281 = dma.vmem_to_hbm [thread:$0]  %s1279, 128, %s1276, %s1233
        $region56: #{_mm_padded.1} parent=31 // pred_fallthru
          _
      $region32: #{_mm_padded.1} parent=5 // pred_fallthru
        _
      %p1282 = scmp.le.s32.totalorder 2, %s22
      // Predicated region
      $region57: #{_mm_padded.1} parent=5 // pred_check
        %p1283 = pneg %p1282
      $region58: #{_mm_padded.1} parent=5 // pred_check_branch
        %1285 = sbr.rel (%p1283) target = $region60
      $region59: #{_mm_padded.1} parent=5 // pred_region
        %s1286 = ssub.s32 %s22, 2
        // Predicated region
        $region61: #{_mm_padded.1} parent=59 // pred_check
          %p1287 = pneg %p154
        $region62: #{_mm_padded.1} parent=59 // pred_check_branch
          %1289 = sbr.rel (%p1287) target = $region64
        $region63: #{_mm_padded.1} parent=59 // pred_region
          %s1290 = sand.u32 %s139, 1
          %s1291 = scalar_lea.sflag [#allocation4], %s1290
          %s1292 = sand.u32 %s139, 1
          %s1293 = smul.addr %s1292, 512
          %s1294 = scalar_lea.vmem [#allocation8], %s1293
          %1295 = dma.done %s1291, 8192
        $region64: #{_mm_padded.1} parent=59 // pred_fallthru
          _
        // Predicated region
        $region65: #{_mm_padded.1} parent=59 // pred_check
          %p1296 = pneg %p182
        $region66: #{_mm_padded.1} parent=59 // pred_check_branch
          %1298 = sbr.rel (%p1296) target = $region68
        $region67: #{_mm_padded.1} parent=59 // pred_region
          %s1299 = sand.u32 %s28, 1
          %s1300 = scalar_lea.sflag [#allocation10], %s1299
          %s1301 = sand.u32 %s167, 1
          %s1302 = smul.addr %s1301, 8
          %s1303 = scalar_lea.vmem [#allocation9], %s1302
          %1304 = dma.done %s1300, 128
        $region68: #{_mm_padded.1} parent=59 // pred_fallthru
          _
        // Predicated region
        $region69: #{_mm_padded.1} parent=59 // pred_check
          %p1305 = pneg %p210
        $region70: #{_mm_padded.1} parent=59 // pred_check_branch
          %1307 = sbr.rel (%p1305) target = $region72
        $region71: #{_mm_padded.1} parent=59 // pred_region
          %s1308 = sand.u32 %s28, 1
          %s1309 = scalar_lea.sflag [#allocation10], %s1308
          %s1310 = sand.u32 %s195, 1
          %s1311 = smul.addr %s1310, 8
          %s1312 = scalar_lea.vmem [#allocation11], %s1311
          %1313 = dma.done %s1309, 128
        $region72: #{_mm_padded.1} parent=59 // pred_fallthru
          _
      $region60: #{_mm_padded.1} parent=5 // pred_fallthru
        _
    $region6: #{_mm_padded.1} parent=1 // loop_footer
      %s26 = sadd.s32 1, %s22
    $region7: #{_mm_padded.1} parent=1 // loop_footer_branch
      %21 = sbr.rel target = $region3
    $region8: #{_mm_padded.1} parent=1 // loop_exit
      _
    %1314 = vsyncpa [#allocation3], 1
    %s1315 = scalar_lea.sflag [#allocation3], 1
    %1316 = vsyncpa %s1315, 1
    %1317 = vsyncpa [#allocation6], 1
    %1318 = vsyncpa [#allocation4], 1
    %s1319 = scalar_lea.sflag [#allocation4], 1
    %1320 = vsyncpa %s1319, 1
    %1321 = vsyncpa [#allocation10], 1
    %s1322 = scalar_lea.sflag [#allocation10], 1
    %1323 = vsyncpa %s1322, 1

</llo_original>
